<compile_context>
chip_gen: v5e
topology: v5e:2x2
jax: 0.10.0
libtpu: 0.0.40
codegen_flags: <defaults>
</compile_context>

<pallas_src>
import math

import jax
import jax.numpy as jnp
from jax.experimental import pallas as pl
from jax.experimental.pallas import tpu as pltpu

LN_EPS = 1e-5  # torch nn.LayerNorm default


# ----------------------------- in-kernel helpers -----------------------------

def _layernorm(x, gamma, beta):
    """f32 LayerNorm over the last axis (gamma/beta broadcast from (1, D))."""
    mu = jnp.mean(x, axis=-1, keepdims=True)
    xc = x - mu
    var = jnp.mean(xc * xc, axis=-1, keepdims=True)
    return xc * jax.lax.rsqrt(var + LN_EPS) * gamma + beta


# ----------------------------- fused per-(batch, layer) encoder kernel -----------------------------

def make_encoder_kernel(d_model, num_heads):
    D = d_model
    H = num_heads
    dk = D // H

    def kernel(x0_ref, mb_ref,
               ln1g_ref, ln1b_ref, wqkv_ref, bqkv_ref,
               wo_ref, bo_ref, ln2g_ref, ln2b_ref,
               w1_ref, b1_ref, w2_ref, b2_ref,
               ng_ref, nb_ref,
               out_ref, x_state):
        l = pl.program_id(1)

        # Load the (scaled + PE'd) embeddings into the carried activation at layer 0.
        @pl.when(l == 0)
        def _():
            x_state[...] = x0_ref[0]                                     # (L, D) f32

        x = x_state[...]

        # --- LayerNorm1 + fused QKV projection (1/sqrt(dk) pre-folded into Q cols) ---
        xn = _layernorm(x, ln1g_ref[0], ln1b_ref[0])
        qkv = (jnp.dot(xn.astype(jnp.bfloat16), wqkv_ref[0],             # bf16 x bf16 -> f32
                       preferred_element_type=jnp.float32) + bqkv_ref[0])  # (L, 3D)

        # --- per-head scaled-dot-product attention, merged lane-dense in-kernel ---
        # TODO(synk): at realistic L / dk, replace this unrolled per-head loop with a
        # head-batched (H, Lq_tile, dk) flash accumulation over Lk tiles.
        mask_row = mb_ref[0]                                             # (1, L) additive bias
        ctx_parts = []
        for h in range(H):                                               # static unroll, H small
            qh = qkv[:, h * dk:(h + 1) * dk].astype(jnp.bfloat16)        # (L, dk)
            kh = qkv[:, D + h * dk:D + (h + 1) * dk].astype(jnp.bfloat16)
            vh = qkv[:, 2 * D + h * dk:2 * D + (h + 1) * dk].astype(jnp.bfloat16)
            s = jnp.dot(qh, kh.T, preferred_element_type=jnp.float32)    # (L, L) f32
            s = s + mask_row                                             # masked_fill -> +(-1e9)
            s = s - jnp.max(s, axis=-1, keepdims=True)
            p = jnp.exp(s)
            p = p * pl.reciprocal(jnp.sum(p, axis=-1, keepdims=True), approx=True)
            ctx_parts.append(jnp.dot(p.astype(jnp.bfloat16), vh,
                                     preferred_element_type=jnp.float32))
        ctx = jnp.concatenate(ctx_parts, axis=-1)                        # (L, D) lane-dense

        # --- out-proj + residual 1 ---
        attn_out = (jnp.dot(ctx.astype(jnp.bfloat16), wo_ref[0],
                            preferred_element_type=jnp.float32) + bo_ref[0])
        x1 = x + attn_out                                                # dropout = identity

        # --- LayerNorm2 + FFN(ReLU) + residual 2 ---
        xn2 = _layernorm(x1, ln2g_ref[0], ln2b_ref[0])
        hid = (jnp.dot(xn2.astype(jnp.bfloat16), w1_ref[0],
                       preferred_element_type=jnp.float32) + b1_ref[0])
        hid = jnp.maximum(hid, 0.0)
        ffn = (jnp.dot(hid.astype(jnp.bfloat16), w2_ref[0],
                       preferred_element_type=jnp.float32) + b2_ref[0])
        x2 = x1 + ffn
        x_state[...] = x2                                                # carry to next layer

        # --- final LayerNorm folded into the last layer step ---
        @pl.when(l == pl.num_programs(1) - 1)
        def _():
            out_ref[0] = _layernorm(x2, ng_ref[...], nb_ref[...])

    return kernel


# ----------------------------- Encoder forward (wrapper) -----------------------------

def encoder_forward(tokens, mask, params, *, d_model, num_heads):
    """tokens: [B, L] int32; mask: [B, 1, L] float32 (1.0 == masked key position)."""
    B, L = tokens.shape
    D = d_model
    num_layers = params["w_qkv"].shape[0]
    F = params["w1"].shape[-1]

    # TODO(synk): data-dependent embedding gather kept in the wrapper; XLA fuses the
    # sqrt(d_model) scale and positional-encoding add into the gather for free.
    src = jnp.take(params["embedding"], tokens, axis=0)                  # (B, L, D) f32
    x0 = (src * math.sqrt(d_model) + params["pe"][:L]).astype(jnp.float32)

    # masked_fill(mask, -1e9) as an additive bias, computed once outside all kernels.
    mask_bias = jnp.where(mask > 0.5, -1e9, 0.0).astype(jnp.float32)     # (B, 1, L)

    batch_blk = lambda b, l: (b, 0, 0)     # per-batch blocks (x0, mask, output)
    layer_blk = lambda b, l: (l, 0, 0)     # per-layer stacked weights
    fixed_blk = lambda b, l: (0, 0)        # grid-invariant final-norm params

    out = pl.pallas_call(
        make_encoder_kernel(d_model, num_heads),
        out_shape=jax.ShapeDtypeStruct((B, L, D), jnp.float32),
        grid=(B, num_layers),
        in_specs=[
            pl.BlockSpec((1, L, D), batch_blk),          # x0 (scaled + PE)
            pl.BlockSpec((1, 1, L), batch_blk),          # additive mask bias
            pl.BlockSpec((1, 1, D), layer_blk),          # ln1 gamma
            pl.BlockSpec((1, 1, D), layer_blk),          # ln1 beta
            pl.BlockSpec((1, D, 3 * D), layer_blk),      # fused QKV weight (bf16)
            pl.BlockSpec((1, 1, 3 * D), layer_blk),      # fused QKV bias (f32)
            pl.BlockSpec((1, D, D), layer_blk),          # out-proj weight (bf16)
            pl.BlockSpec((1, 1, D), layer_blk),          # out-proj bias
            pl.BlockSpec((1, 1, D), layer_blk),          # ln2 gamma
            pl.BlockSpec((1, 1, D), layer_blk),          # ln2 beta
            pl.BlockSpec((1, D, F), layer_blk),          # FFN w1 (bf16)
            pl.BlockSpec((1, 1, F), layer_blk),          # FFN b1
            pl.BlockSpec((1, F, D), layer_blk),          # FFN w2 (bf16)
            pl.BlockSpec((1, 1, D), layer_blk),          # FFN b2
            pl.BlockSpec((1, D), fixed_blk),             # final norm gamma
            pl.BlockSpec((1, D), fixed_blk),             # final norm beta
        ],
        out_specs=pl.BlockSpec((1, L, D), batch_blk),
        scratch_shapes=[pltpu.VMEM((L, D), jnp.float32)],                # carried activation
        compiler_params=pltpu.CompilerParams(
            dimension_semantics=("parallel", "arbitrary")),
    )(x0, mask_bias,
      params["ln1_g"], params["ln1_b"], params["w_qkv"], params["b_qkv"],
      params["w_o"], params["b_o"], params["ln2_g"], params["ln2_b"],
      params["w1"], params["b1"], params["w2"], params["b2"],
      params["norm_g"], params["norm_b"])
    return out


# ----------------------------- parameters & pure-JAX reference -----------------------------

def make_positional_encoding(max_len, d_model):
    pos = jnp.arange(max_len, dtype=jnp.float32)[:, None]
    div = jnp.exp(jnp.arange(0, d_model, 2, dtype=jnp.float32)
                  * (-math.log(10000.0) / d_model))
    pe = jnp.zeros((max_len, d_model), jnp.float32)
    pe = pe.at[:, 0::2].set(jnp.sin(pos * div))
    pe = pe.at[:, 1::2].set(jnp.cos(pos * div))
    return pe


def init_torch_params(key, vocab_size, d_model, d_ff, num_layers):
    """Mirror the PyTorch module's parameters (Linear weights stored as (d_in, d_out))."""
    def linear(k, d_in, d_out):
        kw, kb = jax.random.split(k)
        bound = 1.0 / math.sqrt(d_in)
        w = jax.random.uniform(kw, (d_in, d_out), jnp.float32, -bound, bound)
        b = jax.random.uniform(kb, (1, d_out), jnp.float32, -bound, bound)
        return w, b

    keys = jax.random.split(key, num_layers + 2)
    emb = jax.random.normal(keys[0], (vocab_size, d_model), jnp.float32)
    emb = emb.at[0].set(0.0)                                             # padding_idx = 0

    layers = []
    for i in range(num_layers):
        lk = jax.random.split(keys[1 + i], 10)
        wq, bq = linear(lk[0], d_model, d_model)
        wk, bk = linear(lk[1], d_model, d_model)
        wv, bv = linear(lk[2], d_model, d_model)
        wo, bo = linear(lk[3], d_model, d_model)
        w1, b1 = linear(lk[4], d_model, d_ff)
        w2, b2 = linear(lk[5], d_ff, d_model)
        ln1_g = 1.0 + 0.1 * jax.random.normal(lk[6], (1, d_model), jnp.float32)
        ln1_b = 0.1 * jax.random.normal(lk[7], (1, d_model), jnp.float32)
        ln2_g = 1.0 + 0.1 * jax.random.normal(lk[8], (1, d_model), jnp.float32)
        ln2_b = 0.1 * jax.random.normal(lk[9], (1, d_model), jnp.float32)
        layers.append(dict(wq=wq, bq=bq, wk=wk, bk=bk, wv=wv, bv=bv, wo=wo, bo=bo,
                           w1=w1, b1=b1, w2=w2, b2=b2,
                           ln1_g=ln1_g, ln1_b=ln1_b, ln2_g=ln2_g, ln2_b=ln2_b))
    fk = jax.random.split(keys[-1], 2)
    norm_g = 1.0 + 0.1 * jax.random.normal(fk[0], (1, d_model), jnp.float32)
    norm_b = 0.1 * jax.random.normal(fk[1], (1, d_model), jnp.float32)
    return dict(embedding=emb, layers=layers, norm_g=norm_g, norm_b=norm_b)


def prepare_kernel_params(tp, d_model, num_heads, max_len=1000):
    """Fuse QKV, fold 1/sqrt(d_k) into Q, stack layers on a leading axis, cast weights bf16."""
    dk = d_model // num_heads
    scale = 1.0 / math.sqrt(dk)

    def stack(name):
        return jnp.stack([lp[name] for lp in tp["layers"]], axis=0)

    w_qkv = jnp.stack([jnp.concatenate([lp["wq"] * scale, lp["wk"], lp["wv"]], axis=1)
                       for lp in tp["layers"]], axis=0)                  # (nl, D, 3D)
    b_qkv = jnp.stack([jnp.concatenate([lp["bq"] * scale, lp["bk"], lp["bv"]], axis=1)
                       for lp in tp["layers"]], axis=0)                  # (nl, 1, 3D)
    return dict(
        embedding=tp["embedding"],
        pe=make_positional_encoding(max_len, d_model),
        ln1_g=stack("ln1_g"), ln1_b=stack("ln1_b"),
        w_qkv=w_qkv.astype(jnp.bfloat16), b_qkv=b_qkv,
        w_o=stack("wo").astype(jnp.bfloat16), b_o=stack("bo"),
        ln2_g=stack("ln2_g"), ln2_b=stack("ln2_b"),
        w1=stack("w1").astype(jnp.bfloat16), b1=stack("b1"),
        w2=stack("w2").astype(jnp.bfloat16), b2=stack("b2"),
        norm_g=tp["norm_g"], norm_b=tp["norm_b"])


def _layernorm_ref(x, g, b):
    mu = jnp.mean(x, axis=-1, keepdims=True)
    var = jnp.mean((x - mu) ** 2, axis=-1, keepdims=True)
    return (x - mu) / jnp.sqrt(var + LN_EPS) * g + b


def reference_encoder(tokens, mask, tp, d_model, num_heads, max_len=1000):
    """Pure-JAX f32 reference mirroring the PyTorch Encoder (eval mode)."""
    B, L = tokens.shape
    H, dk = num_heads, d_model // num_heads
    pe = make_positional_encoding(max_len, d_model)
    x = jnp.take(tp["embedding"], tokens, axis=0) * math.sqrt(d_model) + pe[:L]
    maskb = mask[:, None, :, :] > 0.5                                    # (B,1,1,L)
    for lp in tp["layers"]:
        xn = _layernorm_ref(x, lp["ln1_g"], lp["ln1_b"])

        def proj(t, w, b):
            return (t @ w + b).reshape(B, L, H, dk).transpose(0, 2, 1, 3)

        Q = proj(xn, lp["wq"], lp["bq"])
        K = proj(xn, lp["wk"], lp["bk"])
        V = proj(xn, lp["wv"], lp["bv"])
        s = jnp.einsum("bhqd,bhkd->bhqk", Q, K) / math.sqrt(dk)
        s = jnp.where(maskb, -1e9, s)
        p = jax.nn.softmax(s, axis=-1)
        ctx = jnp.einsum("bhqk,bhkd->bhqd", p, V)
        ctx = ctx.transpose(0, 2, 1, 3).reshape(B, L, d_model)
        x = x + (ctx @ lp["wo"] + lp["bo"])
        xn2 = _layernorm_ref(x, lp["ln2_g"], lp["ln2_b"])
        ffn = jnp.maximum(xn2 @ lp["w1"] + lp["b1"], 0.0) @ lp["w2"] + lp["b2"]
        x = x + ffn
    return _layernorm_ref(x, tp["norm_g"], tp["norm_b"])


if __name__ == "__main__":
    vocab_size, d_model, num_heads, d_ff, num_layers = 11, 32, 4, 64, 2
    B, L = 2, 8

    key = jax.random.PRNGKey(0)
    kp, kt = jax.random.split(key)
    torch_params = init_torch_params(kp, vocab_size, d_model, d_ff, num_layers)

    tokens = jax.random.randint(kt, (B, L), 1, vocab_size, dtype=jnp.int32)
    tokens = tokens.at[1, -2:].set(0)                                    # padding tokens
    mask = jnp.zeros((B, 1, L), jnp.float32).at[1, 0, -2:].set(1.0)      # 1.0 == masked key

    kparams = prepare_kernel_params(torch_params, d_model, num_heads)
    out = encoder_forward(tokens, mask, kparams, d_model=d_model, num_heads=num_heads)
    out = jax.block_until_ready(out)

    ref = reference_encoder(tokens, mask, torch_params, d_model, num_heads)
    assert out.shape == (B, L, d_model)
    # bf16 matmul operands + approx reciprocal => slightly looser tolerance than pure f32.
    assert jnp.allclose(out, ref, atol=5e-2, rtol=5e-2), (
        "mismatch vs reference: max |err| = "
        f"{float(jnp.max(jnp.abs(out - ref)))}")
    print("KERNEL_OK")
</pallas_src>

<mosaic_0001>
module attributes {stable_mosaic.version = 11 : i64} {
  func.func @kernel(%arg0: i32, %arg1: i32, %arg2: memref<1x8x32xf32, #tpu.memory_space<vmem>>, %arg3: memref<1x1x8xf32, #tpu.memory_space<vmem>>, %arg4: memref<1x1x32xf32, #tpu.memory_space<vmem>>, %arg5: memref<1x1x32xf32, #tpu.memory_space<vmem>>, %arg6: memref<1x32x96xbf16, #tpu.memory_space<vmem>>, %arg7: memref<1x1x96xf32, #tpu.memory_space<vmem>>, %arg8: memref<1x32x32xbf16, #tpu.memory_space<vmem>>, %arg9: memref<1x1x32xf32, #tpu.memory_space<vmem>>, %arg10: memref<1x1x32xf32, #tpu.memory_space<vmem>>, %arg11: memref<1x1x32xf32, #tpu.memory_space<vmem>>, %arg12: memref<1x32x64xbf16, #tpu.memory_space<vmem>>, %arg13: memref<1x1x64xf32, #tpu.memory_space<vmem>>, %arg14: memref<1x64x32xbf16, #tpu.memory_space<vmem>>, %arg15: memref<1x1x32xf32, #tpu.memory_space<vmem>>, %arg16: memref<1x32xf32, #tpu.memory_space<vmem>>, %arg17: memref<1x32xf32, #tpu.memory_space<vmem>>, %arg18: memref<1x8x32xf32, #tpu.memory_space<vmem>>, %arg19: memref<8x32xf32, #tpu.memory_space<vmem>>) attributes {dimension_semantics = [#tpu.dimension_semantics<parallel>, #tpu.dimension_semantics<arbitrary>], iteration_bounds = array<i64: 2, 2>, scalar_prefetch = 0 : i64, scratch_operands = 1 : i64, tpu.core_type = #tpu.core_type<tc>, window_params = [{transform_indices = @transform_0, window_bounds = array<i64: 1, 8, 32>}, {transform_indices = @transform_1, window_bounds = array<i64: 1, 1, 8>}, {transform_indices = @transform_2, window_bounds = array<i64: 1, 1, 32>}, {transform_indices = @transform_3, window_bounds = array<i64: 1, 1, 32>}, {transform_indices = @transform_4, window_bounds = array<i64: 1, 32, 96>}, {transform_indices = @transform_5, window_bounds = array<i64: 1, 1, 96>}, {transform_indices = @transform_6, window_bounds = array<i64: 1, 32, 32>}, {transform_indices = @transform_7, window_bounds = array<i64: 1, 1, 32>}, {transform_indices = @transform_8, window_bounds = array<i64: 1, 1, 32>}, {transform_indices = @transform_9, window_bounds = array<i64: 1, 1, 32>}, {transform_indices = @transform_10, window_bounds = array<i64: 1, 32, 64>}, {transform_indices = @transform_11, window_bounds = array<i64: 1, 1, 64>}, {transform_indices = @transform_12, window_bounds = array<i64: 1, 64, 32>}, {transform_indices = @transform_13, window_bounds = array<i64: 1, 1, 32>}, {pipeline_mode = #tpu.pipeline_mode<synchronous>, transform_indices = @transform_14, window_bounds = array<i64: 1, 32>}, {pipeline_mode = #tpu.pipeline_mode<synchronous>, transform_indices = @transform_15, window_bounds = array<i64: 1, 32>}, {transform_indices = @transform_16, window_bounds = array<i64: 1, 8, 32>}]} {
    %c0_i32 = arith.constant 0 : i32
    %0 = arith.cmpi eq, %arg1, %c0_i32 : i32
    %1 = arith.extui %0 : i1 to i32
    %c0_i32_0 = arith.constant 0 : i32
    %2 = arith.cmpi ne, %1, %c0_i32_0 : i32
    scf.if %2 {
      %c0_74 = arith.constant 0 : index
      %c0_75 = arith.constant 0 : index
      %c0_76 = arith.constant 0 : index
      %183 = vector.load %arg2[%c0_74, %c0_75, %c0_76] : memref<1x8x32xf32, #tpu.memory_space<vmem>>, vector<1x8x32xf32>
      %184 = vector.shape_cast %183 : vector<1x8x32xf32> to vector<8x32xf32>
      %c0_77 = arith.constant 0 : index
      %c0_78 = arith.constant 0 : index
      %185 = vector.load %arg19[%c0_77, %c0_78] : memref<8x32xf32, #tpu.memory_space<vmem>>, vector<8x32xf32>
      tpu.vector_store %arg19[%c0_77, %c0_78], %184 {strides = array<i32>} : memref<8x32xf32, #tpu.memory_space<vmem>>, vector<8x32xf32>,
    } else {
    }
    %c0 = arith.constant 0 : index
    %c0_1 = arith.constant 0 : index
    %3 = vector.load %arg19[%c0, %c0_1] : memref<8x32xf32, #tpu.memory_space<vmem>>, vector<8x32xf32>
    %c0_2 = arith.constant 0 : index
    %c0_3 = arith.constant 0 : index
    %c0_4 = arith.constant 0 : index
    %4 = vector.load %arg4[%c0_2, %c0_3, %c0_4] : memref<1x1x32xf32, #tpu.memory_space<vmem>>, vector<1x1x32xf32>
    %5 = vector.shape_cast %4 : vector<1x1x32xf32> to vector<1x32xf32>
    %c0_5 = arith.constant 0 : index
    %c0_6 = arith.constant 0 : index
    %c0_7 = arith.constant 0 : index
    %6 = vector.load %arg5[%c0_5, %c0_6, %c0_7] : memref<1x1x32xf32, #tpu.memory_space<vmem>>, vector<1x1x32xf32>
    %7 = vector.shape_cast %6 : vector<1x1x32xf32> to vector<1x32xf32>
    %cst = arith.constant dense<0.000000e+00> : vector<8xf32>
    %8 = vector.multi_reduction <add>, %3, %cst [1] : vector<8x32xf32> to vector<8xf32>
    %9 = vector.shape_cast %8 : vector<8xf32> to vector<8x1xf32>
    %cst_8 = arith.constant 3.200000e+01 : f32
    %10 = vector.broadcast %cst_8 : f32 to vector<8x1xf32>
    %11 = arith.divf %9, %10 : vector<8x1xf32>
    %12 = vector.broadcast %11 : vector<8x1xf32> to vector<8x32xf32>
    %13 = arith.subf %3, %12 : vector<8x32xf32>
    %14 = arith.mulf %13, %13 : vector<8x32xf32>
    %cst_9 = arith.constant dense<0.000000e+00> : vector<8xf32>
    %15 = vector.multi_reduction <add>, %14, %cst_9 [1] : vector<8x32xf32> to vector<8xf32>
    %16 = vector.shape_cast %15 : vector<8xf32> to vector<8x1xf32>
    %cst_10 = arith.constant 3.200000e+01 : f32
    %17 = vector.broadcast %cst_10 : f32 to vector<8x1xf32>
    %18 = arith.divf %16, %17 : vector<8x1xf32>
    %cst_11 = arith.constant 9.99999974E-6 : f32
    %19 = vector.broadcast %cst_11 : f32 to vector<8x1xf32>
    %20 = arith.addf %18, %19 : vector<8x1xf32>
    %21 = math.rsqrt %20 : vector<8x1xf32>
    %22 = vector.broadcast %21 : vector<8x1xf32> to vector<8x32xf32>
    %23 = arith.mulf %13, %22 : vector<8x32xf32>
    %24 = vector.broadcast %5 : vector<1x32xf32> to vector<8x32xf32>
    %25 = arith.mulf %23, %24 : vector<8x32xf32>
    %26 = vector.broadcast %7 : vector<1x32xf32> to vector<8x32xf32>
    %27 = arith.addf %25, %26 : vector<8x32xf32>
    %28 = arith.truncf %27 : vector<8x32xf32> to vector<8x32xbf16>
    %c0_12 = arith.constant 0 : index
    %c0_13 = arith.constant 0 : index
    %c0_14 = arith.constant 0 : index
    %29 = vector.load %arg6[%c0_12, %c0_13, %c0_14] : memref<1x32x96xbf16, #tpu.memory_space<vmem>>, vector<1x32x96xbf16>
    %30 = vector.shape_cast %29 : vector<1x32x96xbf16> to vector<32x96xbf16>
    %cst_15 = arith.constant dense<0.000000e+00> : vector<8x96xf32>
    %31 = tpu.matmul %28, %30, %cst_15 {dimension_numbers = #tpu.dot_dimension_numbers<[1], [0], [0], [1], [0, 0, 1, 1], [], []>} : vector<8x32xbf16>, vector<32x96xbf16>, vector<8x96xf32> -> vector<8x96xf32>
    %c0_16 = arith.constant 0 : index
    %c0_17 = arith.constant 0 : index
    %c0_18 = arith.constant 0 : index
    %32 = vector.load %arg7[%c0_16, %c0_17, %c0_18] : memref<1x1x96xf32, #tpu.memory_space<vmem>>, vector<1x1x96xf32>
    %33 = vector.shape_cast %32 : vector<1x1x96xf32> to vector<1x96xf32>
    %34 = vector.broadcast %33 : vector<1x96xf32> to vector<8x96xf32>
    %35 = arith.addf %31, %34 : vector<8x96xf32>
    %c0_19 = arith.constant 0 : index
    %c0_20 = arith.constant 0 : index
    %c0_21 = arith.constant 0 : index
    %36 = vector.load %arg3[%c0_19, %c0_20, %c0_21] : memref<1x1x8xf32, #tpu.memory_space<vmem>>, vector<1x1x8xf32>
    %37 = vector.shape_cast %36 : vector<1x1x8xf32> to vector<1x8xf32>
    %38 = vector.extract_strided_slice %35 {offsets = [0, 0], sizes = [8, 8], strides = [1, 1]} : vector<8x96xf32> to vector<8x8xf32>
    %39 = arith.truncf %38 : vector<8x8xf32> to vector<8x8xbf16>
    %40 = vector.extract_strided_slice %35 {offsets = [0, 32], sizes = [8, 8], strides = [1, 1]} : vector<8x96xf32> to vector<8x8xf32>
    %41 = arith.truncf %40 : vector<8x8xf32> to vector<8x8xbf16>
    %42 = vector.extract_strided_slice %35 {offsets = [0, 64], sizes = [8, 8], strides = [1, 1]} : vector<8x96xf32> to vector<8x8xf32>
    %43 = arith.truncf %42 : vector<8x8xf32> to vector<8x8xbf16>
    %44 = tpu.transpose %41, [1, 0] : vector<8x8xbf16> -> vector<8x8xbf16>
    %cst_22 = arith.constant dense<0.000000e+00> : vector<8x8xf32>
    %45 = tpu.matmul %39, %44, %cst_22 {dimension_numbers = #tpu.dot_dimension_numbers<[1], [0], [0], [1], [0, 0, 1, 1], [], []>} : vector<8x8xbf16>, vector<8x8xbf16>, vector<8x8xf32> -> vector<8x8xf32>
    %46 = vector.broadcast %37 : vector<1x8xf32> to vector<8x8xf32>
    %47 = arith.addf %45, %46 : vector<8x8xf32>
    %cst_23 = arith.constant dense<0xFF800000> : vector<8xf32>
    %48 = vector.multi_reduction <maximumf>, %47, %cst_23 [1] : vector<8x8xf32> to vector<8xf32>
    %49 = vector.shape_cast %48 : vector<8xf32> to vector<8x1xf32>
    %50 = vector.broadcast %49 : vector<8x1xf32> to vector<8x8xf32>
    %51 = arith.subf %47, %50 : vector<8x8xf32>
    %52 = math.exp %51 : vector<8x8xf32>
    %cst_24 = arith.constant dense<0.000000e+00> : vector<8xf32>
    %53 = vector.multi_reduction <add>, %52, %cst_24 [1] : vector<8x8xf32> to vector<8xf32>
    %54 = vector.shape_cast %53 : vector<8xf32> to vector<8x1xf32>
    %55 = tpu.reciprocal %54 {approx = true} : vector<8x1xf32> -> vector<8x1xf32>
    %56 = vector.broadcast %55 : vector<8x1xf32> to vector<8x8xf32>
    %57 = arith.mulf %52, %56 : vector<8x8xf32>
    %58 = arith.truncf %57 : vector<8x8xf32> to vector<8x8xbf16>
    %cst_25 = arith.constant dense<0.000000e+00> : vector<8x8xf32>
    %59 = tpu.matmul %58, %43, %cst_25 {dimension_numbers = #tpu.dot_dimension_numbers<[1], [0], [0], [1], [0, 0, 1, 1], [], []>} : vector<8x8xbf16>, vector<8x8xbf16>, vector<8x8xf32> -> vector<8x8xf32>
    %60 = vector.extract_strided_slice %35 {offsets = [0, 8], sizes = [8, 8], strides = [1, 1]} : vector<8x96xf32> to vector<8x8xf32>
    %61 = arith.truncf %60 : vector<8x8xf32> to vector<8x8xbf16>
    %62 = vector.extract_strided_slice %35 {offsets = [0, 40], sizes = [8, 8], strides = [1, 1]} : vector<8x96xf32> to vector<8x8xf32>
    %63 = arith.truncf %62 : vector<8x8xf32> to vector<8x8xbf16>
    %64 = vector.extract_strided_slice %35 {offsets = [0, 72], sizes = [8, 8], strides = [1, 1]} : vector<8x96xf32> to vector<8x8xf32>
    %65 = arith.truncf %64 : vector<8x8xf32> to vector<8x8xbf16>
    %66 = tpu.transpose %63, [1, 0] : vector<8x8xbf16> -> vector<8x8xbf16>
    %cst_26 = arith.constant dense<0.000000e+00> : vector<8x8xf32>
    %67 = tpu.matmul %61, %66, %cst_26 {dimension_numbers = #tpu.dot_dimension_numbers<[1], [0], [0], [1], [0, 0, 1, 1], [], []>} : vector<8x8xbf16>, vector<8x8xbf16>, vector<8x8xf32> -> vector<8x8xf32>
    %68 = vector.broadcast %37 : vector<1x8xf32> to vector<8x8xf32>
    %69 = arith.addf %67, %68 : vector<8x8xf32>
    %cst_27 = arith.constant dense<0xFF800000> : vector<8xf32>
    %70 = vector.multi_reduction <maximumf>, %69, %cst_27 [1] : vector<8x8xf32> to vector<8xf32>
    %71 = vector.shape_cast %70 : vector<8xf32> to vector<8x1xf32>
    %72 = vector.broadcast %71 : vector<8x1xf32> to vector<8x8xf32>
    %73 = arith.subf %69, %72 : vector<8x8xf32>
    %74 = math.exp %73 : vector<8x8xf32>
    %cst_28 = arith.constant dense<0.000000e+00> : vector<8xf32>
    %75 = vector.multi_reduction <add>, %74, %cst_28 [1] : vector<8x8xf32> to vector<8xf32>
    %76 = vector.shape_cast %75 : vector<8xf32> to vector<8x1xf32>
    %77 = tpu.reciprocal %76 {approx = true} : vector<8x1xf32> -> vector<8x1xf32>
    %78 = vector.broadcast %77 : vector<8x1xf32> to vector<8x8xf32>
    %79 = arith.mulf %74, %78 : vector<8x8xf32>
    %80 = arith.truncf %79 : vector<8x8xf32> to vector<8x8xbf16>
    %cst_29 = arith.constant dense<0.000000e+00> : vector<8x8xf32>
    %81 = tpu.matmul %80, %65, %cst_29 {dimension_numbers = #tpu.dot_dimension_numbers<[1], [0], [0], [1], [0, 0, 1, 1], [], []>} : vector<8x8xbf16>, vector<8x8xbf16>, vector<8x8xf32> -> vector<8x8xf32>
    %82 = vector.extract_strided_slice %35 {offsets = [0, 16], sizes = [8, 8], strides = [1, 1]} : vector<8x96xf32> to vector<8x8xf32>
    %83 = arith.truncf %82 : vector<8x8xf32> to vector<8x8xbf16>
    %84 = vector.extract_strided_slice %35 {offsets = [0, 48], sizes = [8, 8], strides = [1, 1]} : vector<8x96xf32> to vector<8x8xf32>
    %85 = arith.truncf %84 : vector<8x8xf32> to vector<8x8xbf16>
    %86 = vector.extract_strided_slice %35 {offsets = [0, 80], sizes = [8, 8], strides = [1, 1]} : vector<8x96xf32> to vector<8x8xf32>
    %87 = arith.truncf %86 : vector<8x8xf32> to vector<8x8xbf16>
    %88 = tpu.transpose %85, [1, 0] : vector<8x8xbf16> -> vector<8x8xbf16>
    %cst_30 = arith.constant dense<0.000000e+00> : vector<8x8xf32>
    %89 = tpu.matmul %83, %88, %cst_30 {dimension_numbers = #tpu.dot_dimension_numbers<[1], [0], [0], [1], [0, 0, 1, 1], [], []>} : vector<8x8xbf16>, vector<8x8xbf16>, vector<8x8xf32> -> vector<8x8xf32>
    %90 = vector.broadcast %37 : vector<1x8xf32> to vector<8x8xf32>
    %91 = arith.addf %89, %90 : vector<8x8xf32>
    %cst_31 = arith.constant dense<0xFF800000> : vector<8xf32>
    %92 = vector.multi_reduction <maximumf>, %91, %cst_31 [1] : vector<8x8xf32> to vector<8xf32>
    %93 = vector.shape_cast %92 : vector<8xf32> to vector<8x1xf32>
    %94 = vector.broadcast %93 : vector<8x1xf32> to vector<8x8xf32>
    %95 = arith.subf %91, %94 : vector<8x8xf32>
    %96 = math.exp %95 : vector<8x8xf32>
    %cst_32 = arith.constant dense<0.000000e+00> : vector<8xf32>
    %97 = vector.multi_reduction <add>, %96, %cst_32 [1] : vector<8x8xf32> to vector<8xf32>
    %98 = vector.shape_cast %97 : vector<8xf32> to vector<8x1xf32>
    %99 = tpu.reciprocal %98 {approx = true} : vector<8x1xf32> -> vector<8x1xf32>
    %100 = vector.broadcast %99 : vector<8x1xf32> to vector<8x8xf32>
    %101 = arith.mulf %96, %100 : vector<8x8xf32>
    %102 = arith.truncf %101 : vector<8x8xf32> to vector<8x8xbf16>
    %cst_33 = arith.constant dense<0.000000e+00> : vector<8x8xf32>
    %103 = tpu.matmul %102, %87, %cst_33 {dimension_numbers = #tpu.dot_dimension_numbers<[1], [0], [0], [1], [0, 0, 1, 1], [], []>} : vector<8x8xbf16>, vector<8x8xbf16>, vector<8x8xf32> -> vector<8x8xf32>
    %104 = vector.extract_strided_slice %35 {offsets = [0, 24], sizes = [8, 8], strides = [1, 1]} : vector<8x96xf32> to vector<8x8xf32>
    %105 = arith.truncf %104 : vector<8x8xf32> to vector<8x8xbf16>
    %106 = vector.extract_strided_slice %35 {offsets = [0, 56], sizes = [8, 8], strides = [1, 1]} : vector<8x96xf32> to vector<8x8xf32>
    %107 = arith.truncf %106 : vector<8x8xf32> to vector<8x8xbf16>
    %108 = vector.extract_strided_slice %35 {offsets = [0, 88], sizes = [8, 8], strides = [1, 1]} : vector<8x96xf32> to vector<8x8xf32>
    %109 = arith.truncf %108 : vector<8x8xf32> to vector<8x8xbf16>
    %110 = tpu.transpose %107, [1, 0] : vector<8x8xbf16> -> vector<8x8xbf16>
    %cst_34 = arith.constant dense<0.000000e+00> : vector<8x8xf32>
    %111 = tpu.matmul %105, %110, %cst_34 {dimension_numbers = #tpu.dot_dimension_numbers<[1], [0], [0], [1], [0, 0, 1, 1], [], []>} : vector<8x8xbf16>, vector<8x8xbf16>, vector<8x8xf32> -> vector<8x8xf32>
    %112 = vector.broadcast %37 : vector<1x8xf32> to vector<8x8xf32>
    %113 = arith.addf %111, %112 : vector<8x8xf32>
    %cst_35 = arith.constant dense<0xFF800000> : vector<8xf32>
    %114 = vector.multi_reduction <maximumf>, %113, %cst_35 [1] : vector<8x8xf32> to vector<8xf32>
    %115 = vector.shape_cast %114 : vector<8xf32> to vector<8x1xf32>
    %116 = vector.broadcast %115 : vector<8x1xf32> to vector<8x8xf32>
    %117 = arith.subf %113, %116 : vector<8x8xf32>
    %118 = math.exp %117 : vector<8x8xf32>
    %cst_36 = arith.constant dense<0.000000e+00> : vector<8xf32>
    %119 = vector.multi_reduction <add>, %118, %cst_36 [1] : vector<8x8xf32> to vector<8xf32>
    %120 = vector.shape_cast %119 : vector<8xf32> to vector<8x1xf32>
    %121 = tpu.reciprocal %120 {approx = true} : vector<8x1xf32> -> vector<8x1xf32>
    %122 = vector.broadcast %121 : vector<8x1xf32> to vector<8x8xf32>
    %123 = arith.mulf %118, %122 : vector<8x8xf32>
    %124 = arith.truncf %123 : vector<8x8xf32> to vector<8x8xbf16>
    %cst_37 = arith.constant dense<0.000000e+00> : vector<8x8xf32>
    %125 = tpu.matmul %124, %109, %cst_37 {dimension_numbers = #tpu.dot_dimension_numbers<[1], [0], [0], [1], [0, 0, 1, 1], [], []>} : vector<8x8xbf16>, vector<8x8xbf16>, vector<8x8xf32> -> vector<8x8xf32>
    %126 = tpu.concatenate %59, %81, %103, %125 in 1 : vector<8x8xf32>, vector<8x8xf32>, vector<8x8xf32>, vector<8x8xf32> -> vector<8x32xf32>
    %127 = arith.truncf %126 : vector<8x32xf32> to vector<8x32xbf16>
    %c0_38 = arith.constant 0 : index
    %c0_39 = arith.constant 0 : index
    %c0_40 = arith.constant 0 : index
    %128 = vector.load %arg8[%c0_38, %c0_39, %c0_40] : memref<1x32x32xbf16, #tpu.memory_space<vmem>>, vector<1x32x32xbf16>
    %129 = vector.shape_cast %128 : vector<1x32x32xbf16> to vector<32x32xbf16>
    %cst_41 = arith.constant dense<0.000000e+00> : vector<8x32xf32>
    %130 = tpu.matmul %127, %129, %cst_41 {dimension_numbers = #tpu.dot_dimension_numbers<[1], [0], [0], [1], [0, 0, 1, 1], [], []>} : vector<8x32xbf16>, vector<32x32xbf16>, vector<8x32xf32> -> vector<8x32xf32>
    %c0_42 = arith.constant 0 : index
    %c0_43 = arith.constant 0 : index
    %c0_44 = arith.constant 0 : index
    %131 = vector.load %arg9[%c0_42, %c0_43, %c0_44] : memref<1x1x32xf32, #tpu.memory_space<vmem>>, vector<1x1x32xf32>
    %132 = vector.shape_cast %131 : vector<1x1x32xf32> to vector<1x32xf32>
    %133 = vector.broadcast %132 : vector<1x32xf32> to vector<8x32xf32>
    %134 = arith.addf %130, %133 : vector<8x32xf32>
    %135 = arith.addf %3, %134 : vector<8x32xf32>
    %c0_45 = arith.constant 0 : index
    %c0_46 = arith.constant 0 : index
    %c0_47 = arith.constant 0 : index
    %136 = vector.load %arg10[%c0_45, %c0_46, %c0_47] : memref<1x1x32xf32, #tpu.memory_space<vmem>>, vector<1x1x32xf32>
    %137 = vector.shape_cast %136 : vector<1x1x32xf32> to vector<1x32xf32>
    %c0_48 = arith.constant 0 : index
    %c0_49 = arith.constant 0 : index
    %c0_50 = arith.constant 0 : index
    %138 = vector.load %arg11[%c0_48, %c0_49, %c0_50] : memref<1x1x32xf32, #tpu.memory_space<vmem>>, vector<1x1x32xf32>
    %139 = vector.shape_cast %138 : vector<1x1x32xf32> to vector<1x32xf32>
    %cst_51 = arith.constant dense<0.000000e+00> : vector<8xf32>
    %140 = vector.multi_reduction <add>, %135, %cst_51 [1] : vector<8x32xf32> to vector<8xf32>
    %141 = vector.shape_cast %140 : vector<8xf32> to vector<8x1xf32>
    %cst_52 = arith.constant 3.200000e+01 : f32
    %142 = vector.broadcast %cst_52 : f32 to vector<8x1xf32>
    %143 = arith.divf %141, %142 : vector<8x1xf32>
    %144 = vector.broadcast %143 : vector<8x1xf32> to vector<8x32xf32>
    %145 = arith.subf %135, %144 : vector<8x32xf32>
    %146 = arith.mulf %145, %145 : vector<8x32xf32>
    %cst_53 = arith.constant dense<0.000000e+00> : vector<8xf32>
    %147 = vector.multi_reduction <add>, %146, %cst_53 [1] : vector<8x32xf32> to vector<8xf32>
    %148 = vector.shape_cast %147 : vector<8xf32> to vector<8x1xf32>
    %cst_54 = arith.constant 3.200000e+01 : f32
    %149 = vector.broadcast %cst_54 : f32 to vector<8x1xf32>
    %150 = arith.divf %148, %149 : vector<8x1xf32>
    %cst_55 = arith.constant 9.99999974E-6 : f32
    %151 = vector.broadcast %cst_55 : f32 to vector<8x1xf32>
    %152 = arith.addf %150, %151 : vector<8x1xf32>
    %153 = math.rsqrt %152 : vector<8x1xf32>
    %154 = vector.broadcast %153 : vector<8x1xf32> to vector<8x32xf32>
    %155 = arith.mulf %145, %154 : vector<8x32xf32>
    %156 = vector.broadcast %137 : vector<1x32xf32> to vector<8x32xf32>
    %157 = arith.mulf %155, %156 : vector<8x32xf32>
    %158 = vector.broadcast %139 : vector<1x32xf32> to vector<8x32xf32>
    %159 = arith.addf %157, %158 : vector<8x32xf32>
    %160 = arith.truncf %159 : vector<8x32xf32> to vector<8x32xbf16>
    %c0_56 = arith.constant 0 : index
    %c0_57 = arith.constant 0 : index
    %c0_58 = arith.constant 0 : index
    %161 = vector.load %arg12[%c0_56, %c0_57, %c0_58] : memref<1x32x64xbf16, #tpu.memory_space<vmem>>, vector<1x32x64xbf16>
    %162 = vector.shape_cast %161 : vector<1x32x64xbf16> to vector<32x64xbf16>
    %cst_59 = arith.constant dense<0.000000e+00> : vector<8x64xf32>
    %163 = tpu.matmul %160, %162, %cst_59 {dimension_numbers = #tpu.dot_dimension_numbers<[1], [0], [0], [1], [0, 0, 1, 1], [], []>} : vector<8x32xbf16>, vector<32x64xbf16>, vector<8x64xf32> -> vector<8x64xf32>
    %c0_60 = arith.constant 0 : index
    %c0_61 = arith.constant 0 : index
    %c0_62 = arith.constant 0 : index
    %164 = vector.load %arg13[%c0_60, %c0_61, %c0_62] : memref<1x1x64xf32, #tpu.memory_space<vmem>>, vector<1x1x64xf32>
    %165 = vector.shape_cast %164 : vector<1x1x64xf32> to vector<1x64xf32>
    %166 = vector.broadcast %165 : vector<1x64xf32> to vector<8x64xf32>
    %167 = arith.addf %163, %166 : vector<8x64xf32>
    %cst_63 = arith.constant 0.000000e+00 : f32
    %168 = vector.broadcast %cst_63 : f32 to vector<8x64xf32>
    %169 = arith.maximumf %167, %168 : vector<8x64xf32>
    %170 = arith.truncf %169 : vector<8x64xf32> to vector<8x64xbf16>
    %c0_64 = arith.constant 0 : index
    %c0_65 = arith.constant 0 : index
    %c0_66 = arith.constant 0 : index
    %171 = vector.load %arg14[%c0_64, %c0_65, %c0_66] : memref<1x64x32xbf16, #tpu.memory_space<vmem>>, vector<1x64x32xbf16>
    %172 = vector.shape_cast %171 : vector<1x64x32xbf16> to vector<64x32xbf16>
    %cst_67 = arith.constant dense<0.000000e+00> : vector<8x32xf32>
    %173 = tpu.matmul %170, %172, %cst_67 {dimension_numbers = #tpu.dot_dimension_numbers<[1], [0], [0], [1], [0, 0, 1, 1], [], []>} : vector<8x64xbf16>, vector<64x32xbf16>, vector<8x32xf32> -> vector<8x32xf32>
    %c0_68 = arith.constant 0 : index
    %c0_69 = arith.constant 0 : index
    %c0_70 = arith.constant 0 : index
    %174 = vector.load %arg15[%c0_68, %c0_69, %c0_70] : memref<1x1x32xf32, #tpu.memory_space<vmem>>, vector<1x1x32xf32>
    %175 = vector.shape_cast %174 : vector<1x1x32xf32> to vector<1x32xf32>
    %176 = vector.broadcast %175 : vector<1x32xf32> to vector<8x32xf32>
    %177 = arith.addf %173, %176 : vector<8x32xf32>
    %178 = arith.addf %135, %177 : vector<8x32xf32>
    %c0_71 = arith.constant 0 : index
    %c0_72 = arith.constant 0 : index
    %179 = vector.load %arg19[%c0_71, %c0_72] : memref<8x32xf32, #tpu.memory_space<vmem>>, vector<8x32xf32>
    tpu.vector_store %arg19[%c0_71, %c0_72], %178 {strides = array<i32>} : memref<8x32xf32, #tpu.memory_space<vmem>>, vector<8x32xf32>,
    %c1_i32 = arith.constant 1 : i32
    %180 = arith.cmpi eq, %arg1, %c1_i32 : i32
    %181 = arith.extui %180 : i1 to i32
    %c0_i32_73 = arith.constant 0 : i32
    %182 = arith.cmpi ne, %181, %c0_i32_73 : i32
    scf.if %182 {
      %c0_74 = arith.constant 0 : index
      %c0_75 = arith.constant 0 : index
      %183 = vector.load %arg16[%c0_74, %c0_75] : memref<1x32xf32, #tpu.memory_space<vmem>>, vector<1x32xf32>
      %c0_76 = arith.constant 0 : index
      %c0_77 = arith.constant 0 : index
      %184 = vector.load %arg17[%c0_76, %c0_77] : memref<1x32xf32, #tpu.memory_space<vmem>>, vector<1x32xf32>
      %cst_78 = arith.constant dense<0.000000e+00> : vector<8xf32>
      %185 = vector.multi_reduction <add>, %178, %cst_78 [1] : vector<8x32xf32> to vector<8xf32>
      %186 = vector.shape_cast %185 : vector<8xf32> to vector<8x1xf32>
      %cst_79 = arith.constant 3.200000e+01 : f32
      %187 = vector.broadcast %cst_79 : f32 to vector<8x1xf32>
      %188 = arith.divf %186, %187 : vector<8x1xf32>
      %189 = vector.broadcast %188 : vector<8x1xf32> to vector<8x32xf32>
      %190 = arith.subf %178, %189 : vector<8x32xf32>
      %191 = arith.mulf %190, %190 : vector<8x32xf32>
      %cst_80 = arith.constant dense<0.000000e+00> : vector<8xf32>
      %192 = vector.multi_reduction <add>, %191, %cst_80 [1] : vector<8x32xf32> to vector<8xf32>
      %193 = vector.shape_cast %192 : vector<8xf32> to vector<8x1xf32>
      %cst_81 = arith.constant 3.200000e+01 : f32
      %194 = vector.broadcast %cst_81 : f32 to vector<8x1xf32>
      %195 = arith.divf %193, %194 : vector<8x1xf32>
      %cst_82 = arith.constant 9.99999974E-6 : f32
      %196 = vector.broadcast %cst_82 : f32 to vector<8x1xf32>
      %197 = arith.addf %195, %196 : vector<8x1xf32>
      %198 = math.rsqrt %197 : vector<8x1xf32>
      %199 = vector.broadcast %198 : vector<8x1xf32> to vector<8x32xf32>
      %200 = arith.mulf %190, %199 : vector<8x32xf32>
      %201 = vector.broadcast %183 : vector<1x32xf32> to vector<8x32xf32>
      %202 = arith.mulf %200, %201 : vector<8x32xf32>
      %203 = vector.broadcast %184 : vector<1x32xf32> to vector<8x32xf32>
      %204 = arith.addf %202, %203 : vector<8x32xf32>
      %c0_83 = arith.constant 0 : index
      %c0_84 = arith.constant 0 : index
      %c0_85 = arith.constant 0 : index
      %205 = vector.load %arg18[%c0_83, %c0_84, %c0_85] : memref<1x8x32xf32, #tpu.memory_space<vmem>>, vector<1x8x32xf32>
      %206 = vector.shape_cast %205 : vector<1x8x32xf32> to vector<8x32xf32>
      %207 = vector.shape_cast %204 : vector<8x32xf32> to vector<1x8x32xf32>
      tpu.vector_store %arg18[%c0_83, %c0_84, %c0_85], %207 {strides = array<i32>} : memref<1x8x32xf32, #tpu.memory_space<vmem>>, vector<1x8x32xf32>,
    } else {
    }
    return
  }
  func.func @transform_0(%arg0: i32, %arg1: i32) -> (i32, i32, i32) {
    %c0_i32 = arith.constant 0 : i32
    %c0_i32_0 = arith.constant 0 : i32
    %c0_i32_1 = arith.constant 0 : i32
    return %arg0, %c0_i32, %c0_i32_0 : i32, i32, i32
  }
  func.func @transform_1(%arg0: i32, %arg1: i32) -> (i32, i32, i32) {
    %c0_i32 = arith.constant 0 : i32
    %c0_i32_0 = arith.constant 0 : i32
    %c0_i32_1 = arith.constant 0 : i32
    return %arg0, %c0_i32, %c0_i32_0 : i32, i32, i32
  }
  func.func @transform_2(%arg0: i32, %arg1: i32) -> (i32, i32, i32) {
    %c0_i32 = arith.constant 0 : i32
    %c0_i32_0 = arith.constant 0 : i32
    %c0_i32_1 = arith.constant 0 : i32
    return %arg1, %c0_i32, %c0_i32_0 : i32, i32, i32
  }
  func.func @transform_3(%arg0: i32, %arg1: i32) -> (i32, i32, i32) {
    %c0_i32 = arith.constant 0 : i32
    %c0_i32_0 = arith.constant 0 : i32
    %c0_i32_1 = arith.constant 0 : i32
    return %arg1, %c0_i32, %c0_i32_0 : i32, i32, i32
  }
  func.func @transform_4(%arg0: i32, %arg1: i32) -> (i32, i32, i32) {
    %c0_i32 = arith.constant 0 : i32
    %c0_i32_0 = arith.constant 0 : i32
    %c0_i32_1 = arith.constant 0 : i32
    return %arg1, %c0_i32, %c0_i32_0 : i32, i32, i32
  }
  func.func @transform_5(%arg0: i32, %arg1: i32) -> (i32, i32, i32) {
    %c0_i32 = arith.constant 0 : i32
    %c0_i32_0 = arith.constant 0 : i32
    %c0_i32_1 = arith.constant 0 : i32
    return %arg1, %c0_i32, %c0_i32_0 : i32, i32, i32
  }
  func.func @transform_6(%arg0: i32, %arg1: i32) -> (i32, i32, i32) {
    %c0_i32 = arith.constant 0 : i32
    %c0_i32_0 = arith.constant 0 : i32
    %c0_i32_1 = arith.constant 0 : i32
    return %arg1, %c0_i32, %c0_i32_0 : i32, i32, i32
  }
  func.func @transform_7(%arg0: i32, %arg1: i32) -> (i32, i32, i32) {
    %c0_i32 = arith.constant 0 : i32
    %c0_i32_0 = arith.constant 0 : i32
    %c0_i32_1 = arith.constant 0 : i32
    return %arg1, %c0_i32, %c0_i32_0 : i32, i32, i32
  }
  func.func @transform_8(%arg0: i32, %arg1: i32) -> (i32, i32, i32) {
    %c0_i32 = arith.constant 0 : i32
    %c0_i32_0 = arith.constant 0 : i32
    %c0_i32_1 = arith.constant 0 : i32
    return %arg1, %c0_i32, %c0_i32_0 : i32, i32, i32
  }
  func.func @transform_9(%arg0: i32, %arg1: i32) -> (i32, i32, i32) {
    %c0_i32 = arith.constant 0 : i32
    %c0_i32_0 = arith.constant 0 : i32
    %c0_i32_1 = arith.constant 0 : i32
    return %arg1, %c0_i32, %c0_i32_0 : i32, i32, i32
  }
  func.func @transform_10(%arg0: i32, %arg1: i32) -> (i32, i32, i32) {
    %c0_i32 = arith.constant 0 : i32
    %c0_i32_0 = arith.constant 0 : i32
    %c0_i32_1 = arith.constant 0 : i32
    return %arg1, %c0_i32, %c0_i32_0 : i32, i32, i32
  }
  func.func @transform_11(%arg0: i32, %arg1: i32) -> (i32, i32, i32) {
    %c0_i32 = arith.constant 0 : i32
    %c0_i32_0 = arith.constant 0 : i32
    %c0_i32_1 = arith.constant 0 : i32
    return %arg1, %c0_i32, %c0_i32_0 : i32, i32, i32
  }
  func.func @transform_12(%arg0: i32, %arg1: i32) -> (i32, i32, i32) {
    %c0_i32 = arith.constant 0 : i32
    %c0_i32_0 = arith.constant 0 : i32
    %c0_i32_1 = arith.constant 0 : i32
    return %arg1, %c0_i32, %c0_i32_0 : i32, i32, i32
  }
  func.func @transform_13(%arg0: i32, %arg1: i32) -> (i32, i32, i32) {
    %c0_i32 = arith.constant 0 : i32
    %c0_i32_0 = arith.constant 0 : i32
    %c0_i32_1 = arith.constant 0 : i32
    return %arg1, %c0_i32, %c0_i32_0 : i32, i32, i32
  }
  func.func @transform_14(%arg0: i32, %arg1: i32) -> (i32, i32) {
    %c0_i32 = arith.constant 0 : i32
    %c0_i32_0 = arith.constant 0 : i32
    %c0_i32_1 = arith.constant 0 : i32
    return %c0_i32, %c0_i32_0 : i32, i32
  }
  func.func @transform_15(%arg0: i32, %arg1: i32) -> (i32, i32) {
    %c0_i32 = arith.constant 0 : i32
    %c0_i32_0 = arith.constant 0 : i32
    %c0_i32_1 = arith.constant 0 : i32
    return %c0_i32, %c0_i32_0 : i32, i32
  }
  func.func @transform_16(%arg0: i32, %arg1: i32) -> (i32, i32, i32) {
    %c0_i32 = arith.constant 0 : i32
    %c0_i32_0 = arith.constant 0 : i32
    %c0_i32_1 = arith.constant 0 : i32
    return %arg0, %c0_i32, %c0_i32_0 : i32, i32, i32
  }
}

</mosaic_0001>

<llo_original>
// kernel: tpu_custom_call.1
$region0: #{tpu_custom_call.1}
  #allocation0 [shape = 'u32[]', space=smem, size = 0x4, offset = 0x4, fixed_abs, tag = 'smem constant byte address 0x4 - core index']
  #allocation1 [shape = 'u32[72,128]{1,0:T(1,128)}', space=vmem, size = 0x9000, scoped, tag = 'internal scratch']
  #allocation2 [shape = 'f32[8,32]{1,0:T(8,128)}', space=vmem, size = 0x1000, scoped, tag = 'scratch operand']
  %s0 = inlined_call_operand.hbm [shape: f32[2,8,32], index: 0, kind: input, shape index: {}]
  %s1 = inlined_call_operand.hbm [shape: f32[2,1,8], index: 1, kind: input, shape index: {}]
  %s2 = inlined_call_operand.hbm [shape: f32[2,1,32], index: 2, kind: input, shape index: {}]
  %s3 = inlined_call_operand.hbm [shape: f32[2,1,32], index: 3, kind: input, shape index: {}]
  %s4 = inlined_call_operand.vmem [shape: bf16[2,32,96], index: 4, kind: input, shape index: {}]
  %s5 = inlined_call_operand.vmem [shape: f32[2,1,96], index: 5, kind: input, shape index: {}]
  %s6 = inlined_call_operand.vmem [shape: bf16[2,32,32], index: 6, kind: input, shape index: {}]
  %s7 = inlined_call_operand.vmem [shape: f32[2,1,32], index: 7, kind: input, shape index: {}]
  %s8 = inlined_call_operand.vmem [shape: f32[2,1,32], index: 8, kind: input, shape index: {}]
  %s9 = inlined_call_operand.hbm [shape: f32[2,1,32], index: 9, kind: input, shape index: {}]
  %s10 = inlined_call_operand.vmem [shape: bf16[2,32,64], index: 10, kind: input, shape index: {}]
  %s11 = inlined_call_operand.vmem [shape: f32[2,1,64], index: 11, kind: input, shape index: {}]
  %s12 = inlined_call_operand.vmem [shape: bf16[2,64,32], index: 12, kind: input, shape index: {}]
  %s13 = inlined_call_operand.vmem [shape: f32[2,1,32], index: 13, kind: input, shape index: {}]
  %s14 = inlined_call_operand.vmem [shape: f32[1,32], index: 14, kind: input, shape index: {}]
  %s15 = inlined_call_operand.vmem [shape: f32[1,32], index: 15, kind: input, shape index: {}]
  %s16 = inlined_call_operand.hbm [shape: f32[2,8,32], index: 16, kind: output, shape index: {}]
  %s17 = sld [smem:[#allocation0]]
  $region125: #{tpu_custom_call.1} parent=0
    _
  %s19 = ssub.s32 1, %s17
  %s20 = scalar_select 0, %s19, %s17
  $region1: #{tpu_custom_call.1} parent=0
    #allocation3 [shape = 'u8[8192]{0}', space=vmem, size = 0x2000, scoped, tag = 'input window, operand 0']
    #allocation4 [shape = 's32[2]{0}', space=sflag, size = 0x8, scoped, tag = 'scoped memory for tpu_custom_call.1']
    #allocation5 [shape = 's32[2]{0}', space=sflag, size = 0x8, scoped, tag = 'scoped memory for tpu_custom_call.1']
    #allocation6 [shape = 'u8[1024]{0}', space=vmem, size = 0x400, scoped, tag = 'input window, operand 1']
    #allocation7 [shape = 's32[2]{0}', space=sflag, size = 0x8, scoped, tag = 'scoped memory for tpu_custom_call.1']
    #allocation8 [shape = 'u8[1024]{0}', space=vmem, size = 0x400, scoped, tag = 'input window, operand 2']
    #allocation9 [shape = 'u8[1024]{0}', space=vmem, size = 0x400, scoped, tag = 'input window, operand 3']
    #allocation10 [shape = 's32[2]{0}', space=sflag, size = 0x8, scoped, tag = 'scoped memory for tpu_custom_call.1']
    #allocation11 [shape = 'u8[1024]{0}', space=vmem, size = 0x400, scoped, tag = 'input window, operand 9']
    #allocation12 [shape = 'u8[8192]{0}', space=vmem, size = 0x2000, scoped, tag = 'output window, operand 0']
    %21 = vsyncpa [#allocation4], 0
    %s22 = scalar_lea.sflag [#allocation4], 1
    %23 = vsyncpa %s22, 0
    %24 = vsyncpa [#allocation7], 0
    %s25 = scalar_lea.sflag [#allocation7], 1
    %26 = vsyncpa %s25, 0
    %27 = vsyncpa [#allocation10], 0
    %s28 = scalar_lea.sflag [#allocation10], 1
    %29 = vsyncpa %s28, 0
    %30 = vsyncpa [#allocation5], 0
    %s31 = scalar_lea.sflag [#allocation5], 1
    %32 = vsyncpa %s31, 0
    loop: start=0, step=1, limit=6
    $region2: #{tpu_custom_call.1} parent=1 // loop_pre_header
      _
    $region3: #{tpu_custom_call.1} parent=1 // loop_header
      %s34 = sphi 0, %s38
      %p35 = scmp.ge.s32.totalorder %s34, 6
      %s41 = sphi 0, %s53
      %s42 = sphi 0, %s49
      %s43 = sphi 0, %s41
      %s44 = sphi 0, %s42
      %s45 = sphi 0, %s43
      %s46 = sphi 0, %s44
      %s56 = sphi 0, %s58
      %s59 = sphi 0, %s56
      %s60 = sphi 0, %s59
      %s76 = sphi 0, %s60
      %s82 = sphi 0, %s84
      %s85 = sphi 0, %s82
      %s86 = sphi 0, %s85
      %s102 = sphi 0, %s86
      %s108 = sphi 0, %s110
      %s111 = sphi 0, %s108
      %s112 = sphi 0, %s111
      %s128 = sphi 0, %s112
      %s134 = sphi 0, %s136
      %s137 = sphi 0, %s134
      %s138 = sphi 0, %s137
      %s154 = sphi 0, %s138
      %s160 = sphi 0, %s162
      %s163 = sphi 0, %s160
      %s164 = sphi 0, %s163
      %s180 = sphi 0, %s164
      %s186 = sphi 0, %s188
      %s189 = sphi 0, %s186
      %s190 = sphi 0, %s189
      %s206 = sphi 0, %s190
      %s212 = sphi 0, %s214
      %s215 = sphi 0, %s212
      %s216 = sphi 0, %s215
      %s232 = sphi 0, %s216
      %s238 = sphi 0, %s240
      %s241 = sphi 0, %s238
      %s242 = sphi 0, %s241
      %s258 = sphi 0, %s242
      %s264 = sphi 0, %s266
      %s267 = sphi 0, %s264
      %s268 = sphi 0, %s267
      %s284 = sphi 0, %s268
      %s290 = sphi 0, %s292
      %s293 = sphi 0, %s290
      %s294 = sphi 0, %s293
      %s310 = sphi 0, %s294
      %s316 = sphi 0, %s318
      %s319 = sphi 0, %s316
      %s320 = sphi 0, %s319
      %s336 = sphi 0, %s320
      %s342 = sphi 0, %s344
      %s345 = sphi 0, %s342
      %s346 = sphi 0, %s345
      %s362 = sphi 0, %s346
      %s368 = sphi 0, %s370
      %s371 = sphi 0, %s368
      %s372 = sphi 0, %s371
      %s388 = sphi 0, %s372
      %s394 = sphi 0, %s396
      %s397 = sphi 0, %s394
      %s398 = sphi 0, %s397
      %s414 = sphi 0, %s398
      %s418 = sphi 0, %s418
      %s420 = sphi 0, %s418
      %s421 = sphi 0, %s420
      %s435 = sphi 0, %s421
      %s439 = sphi 0, %s439
      %s441 = sphi 0, %s439
      %s442 = sphi 0, %s441
      %s456 = sphi 0, %s442
      %s462 = sphi 0, %s464
      %s465 = sphi 0, %s462
      %s466 = sphi 0, %s465
      %s482 = sphi 0, %s466
    $region4: #{tpu_custom_call.1} parent=1 // loop_header_branch
      %37 = sbr.rel (%p35) target = $region8
    $region5: #{tpu_custom_call.1} parent=1 // loop_body
      %s39 = ssub.s32 %s34, 1
      %s40 = ssub.s32 %s34, 2
      %s47 = sadd.s32 1, %s42
      %p48 = scmp.ge.s32.totalorder %s47, 2
      %s49 = scalar_select %p48, 0, %s47
      %s50 = sadd.s32 1, %s41
      %s51 = scalar_select %p48, %s50, %s41
      %p52 = scmp.ge.s32.totalorder %s51, 2
      %s53 = scalar_select %p52, 0, %s51
      %s54 = ssub.s32 %s41, %s53
      %p55 = scmp.eq.s32.totalorder %s54, 0
      %s57 = sadd.s32 %s56, 1
      %s58 = scalar_select %p55, %s56, %s57
      %p61 = pneg %p55
      %p62 = scmp.eq.s32.totalorder %s34, 3
      %p63 = por %p61, %p62
      %p64 = scmp.ne.s32.totalorder %s56, %s59
      %p65 = scmp.eq.s32.totalorder %s34, 0
      %p66 = por %p64, %p65
      %p67 = scmp.ne.s32.totalorder %s56, %s59
      %p68 = scmp.eq.s32.totalorder %s39, 3
      %p69 = por %p67, %p68
      %p70 = scmp.ne.s32.totalorder %s59, %s60
      %p71 = scmp.eq.s32.totalorder %s39, 0
      %p72 = por %p70, %p71
      %p73 = scmp.ne.s32.totalorder %s59, %s60
      %p74 = scmp.eq.s32.totalorder %s40, 3
      %p75 = por %p73, %p74
      %p77 = scmp.ne.s32.totalorder %s60, %s76
      %p78 = scmp.eq.s32.totalorder %s40, 0
      %p79 = por %p77, %p78
      %s80 = ssub.s32 %s41, %s53
      %p81 = scmp.eq.s32.totalorder %s80, 0
      %s83 = sadd.s32 %s82, 1
      %s84 = scalar_select %p81, %s82, %s83
      %p87 = pneg %p81
      %p88 = scmp.eq.s32.totalorder %s34, 3
      %p89 = por %p87, %p88
      %p90 = scmp.ne.s32.totalorder %s82, %s85
      %p91 = scmp.eq.s32.totalorder %s34, 0
      %p92 = por %p90, %p91
      %p93 = scmp.ne.s32.totalorder %s82, %s85
      %p94 = scmp.eq.s32.totalorder %s39, 3
      %p95 = por %p93, %p94
      %p96 = scmp.ne.s32.totalorder %s85, %s86
      %p97 = scmp.eq.s32.totalorder %s39, 0
      %p98 = por %p96, %p97
      %p99 = scmp.ne.s32.totalorder %s85, %s86
      %p100 = scmp.eq.s32.totalorder %s40, 3
      %p101 = por %p99, %p100
      %p103 = scmp.ne.s32.totalorder %s86, %s102
      %p104 = scmp.eq.s32.totalorder %s40, 0
      %p105 = por %p103, %p104
      %s106 = ssub.s32 %s42, %s49
      %p107 = scmp.eq.s32.totalorder %s106, 0
      %s109 = sadd.s32 %s108, 1
      %s110 = scalar_select %p107, %s108, %s109
      %p113 = pneg %p107
      %p114 = scmp.eq.s32.totalorder %s34, 3
      %p115 = por %p113, %p114
      %p116 = scmp.ne.s32.totalorder %s108, %s111
      %p117 = scmp.eq.s32.totalorder %s34, 0
      %p118 = por %p116, %p117
      %p119 = scmp.ne.s32.totalorder %s108, %s111
      %p120 = scmp.eq.s32.totalorder %s39, 3
      %p121 = por %p119, %p120
      %p122 = scmp.ne.s32.totalorder %s111, %s112
      %p123 = scmp.eq.s32.totalorder %s39, 0
      %p124 = por %p122, %p123
      %p125 = scmp.ne.s32.totalorder %s111, %s112
      %p126 = scmp.eq.s32.totalorder %s40, 3
      %p127 = por %p125, %p126
      %p129 = scmp.ne.s32.totalorder %s112, %s128
      %p130 = scmp.eq.s32.totalorder %s40, 0
      %p131 = por %p129, %p130
      %s132 = ssub.s32 %s42, %s49
      %p133 = scmp.eq.s32.totalorder %s132, 0
      %s135 = sadd.s32 %s134, 1
      %s136 = scalar_select %p133, %s134, %s135
      %p139 = pneg %p133
      %p140 = scmp.eq.s32.totalorder %s34, 3
      %p141 = por %p139, %p140
      %p142 = scmp.ne.s32.totalorder %s134, %s137
      %p143 = scmp.eq.s32.totalorder %s34, 0
      %p144 = por %p142, %p143
      %p145 = scmp.ne.s32.totalorder %s134, %s137
      %p146 = scmp.eq.s32.totalorder %s39, 3
      %p147 = por %p145, %p146
      %p148 = scmp.ne.s32.totalorder %s137, %s138
      %p149 = scmp.eq.s32.totalorder %s39, 0
      %p150 = por %p148, %p149
      %p151 = scmp.ne.s32.totalorder %s137, %s138
      %p152 = scmp.eq.s32.totalorder %s40, 3
      %p153 = por %p151, %p152
      %p155 = scmp.ne.s32.totalorder %s138, %s154
      %p156 = scmp.eq.s32.totalorder %s40, 0
      %p157 = por %p155, %p156
      %s158 = ssub.s32 %s42, %s49
      %p159 = scmp.eq.s32.totalorder %s158, 0
      %s161 = sadd.s32 %s160, 1
      %s162 = scalar_select %p159, %s160, %s161
      %p165 = pneg %p159
      %p166 = scmp.eq.s32.totalorder %s34, 3
      %p167 = por %p165, %p166
      %p168 = scmp.ne.s32.totalorder %s160, %s163
      %p169 = scmp.eq.s32.totalorder %s34, 0
      %p170 = por %p168, %p169
      %p171 = scmp.ne.s32.totalorder %s160, %s163
      %p172 = scmp.eq.s32.totalorder %s39, 3
      %p173 = por %p171, %p172
      %p174 = scmp.ne.s32.totalorder %s163, %s164
      %p175 = scmp.eq.s32.totalorder %s39, 0
      %p176 = por %p174, %p175
      %p177 = scmp.ne.s32.totalorder %s163, %s164
      %p178 = scmp.eq.s32.totalorder %s40, 3
      %p179 = por %p177, %p178
      %p181 = scmp.ne.s32.totalorder %s164, %s180
      %p182 = scmp.eq.s32.totalorder %s40, 0
      %p183 = por %p181, %p182
      %s184 = ssub.s32 %s42, %s49
      %p185 = scmp.eq.s32.totalorder %s184, 0
      %s187 = sadd.s32 %s186, 1
      %s188 = scalar_select %p185, %s186, %s187
      %p191 = pneg %p185
      %p192 = scmp.eq.s32.totalorder %s34, 3
      %p193 = por %p191, %p192
      %p194 = scmp.ne.s32.totalorder %s186, %s189
      %p195 = scmp.eq.s32.totalorder %s34, 0
      %p196 = por %p194, %p195
      %p197 = scmp.ne.s32.totalorder %s186, %s189
      %p198 = scmp.eq.s32.totalorder %s39, 3
      %p199 = por %p197, %p198
      %p200 = scmp.ne.s32.totalorder %s189, %s190
      %p201 = scmp.eq.s32.totalorder %s39, 0
      %p202 = por %p200, %p201
      %p203 = scmp.ne.s32.totalorder %s189, %s190
      %p204 = scmp.eq.s32.totalorder %s40, 3
      %p205 = por %p203, %p204
      %p207 = scmp.ne.s32.totalorder %s190, %s206
      %p208 = scmp.eq.s32.totalorder %s40, 0
      %p209 = por %p207, %p208
      %s210 = ssub.s32 %s42, %s49
      %p211 = scmp.eq.s32.totalorder %s210, 0
      %s213 = sadd.s32 %s212, 1
      %s214 = scalar_select %p211, %s212, %s213
      %p217 = pneg %p211
      %p218 = scmp.eq.s32.totalorder %s34, 3
      %p219 = por %p217, %p218
      %p220 = scmp.ne.s32.totalorder %s212, %s215
      %p221 = scmp.eq.s32.totalorder %s34, 0
      %p222 = por %p220, %p221
      %p223 = scmp.ne.s32.totalorder %s212, %s215
      %p224 = scmp.eq.s32.totalorder %s39, 3
      %p225 = por %p223, %p224
      %p226 = scmp.ne.s32.totalorder %s215, %s216
      %p227 = scmp.eq.s32.totalorder %s39, 0
      %p228 = por %p226, %p227
      %p229 = scmp.ne.s32.totalorder %s215, %s216
      %p230 = scmp.eq.s32.totalorder %s40, 3
      %p231 = por %p229, %p230
      %p233 = scmp.ne.s32.totalorder %s216, %s232
      %p234 = scmp.eq.s32.totalorder %s40, 0
      %p235 = por %p233, %p234
      %s236 = ssub.s32 %s42, %s49
      %p237 = scmp.eq.s32.totalorder %s236, 0
      %s239 = sadd.s32 %s238, 1
      %s240 = scalar_select %p237, %s238, %s239
      %p243 = pneg %p237
      %p244 = scmp.eq.s32.totalorder %s34, 3
      %p245 = por %p243, %p244
      %p246 = scmp.ne.s32.totalorder %s238, %s241
      %p247 = scmp.eq.s32.totalorder %s34, 0
      %p248 = por %p246, %p247
      %p249 = scmp.ne.s32.totalorder %s238, %s241
      %p250 = scmp.eq.s32.totalorder %s39, 3
      %p251 = por %p249, %p250
      %p252 = scmp.ne.s32.totalorder %s241, %s242
      %p253 = scmp.eq.s32.totalorder %s39, 0
      %p254 = por %p252, %p253
      %p255 = scmp.ne.s32.totalorder %s241, %s242
      %p256 = scmp.eq.s32.totalorder %s40, 3
      %p257 = por %p255, %p256
      %p259 = scmp.ne.s32.totalorder %s242, %s258
      %p260 = scmp.eq.s32.totalorder %s40, 0
      %p261 = por %p259, %p260
      %s262 = ssub.s32 %s42, %s49
      %p263 = scmp.eq.s32.totalorder %s262, 0
      %s265 = sadd.s32 %s264, 1
      %s266 = scalar_select %p263, %s264, %s265
      %p269 = pneg %p263
      %p270 = scmp.eq.s32.totalorder %s34, 3
      %p271 = por %p269, %p270
      %p272 = scmp.ne.s32.totalorder %s264, %s267
      %p273 = scmp.eq.s32.totalorder %s34, 0
      %p274 = por %p272, %p273
      %p275 = scmp.ne.s32.totalorder %s264, %s267
      %p276 = scmp.eq.s32.totalorder %s39, 3
      %p277 = por %p275, %p276
      %p278 = scmp.ne.s32.totalorder %s267, %s268
      %p279 = scmp.eq.s32.totalorder %s39, 0
      %p280 = por %p278, %p279
      %p281 = scmp.ne.s32.totalorder %s267, %s268
      %p282 = scmp.eq.s32.totalorder %s40, 3
      %p283 = por %p281, %p282
      %p285 = scmp.ne.s32.totalorder %s268, %s284
      %p286 = scmp.eq.s32.totalorder %s40, 0
      %p287 = por %p285, %p286
      %s288 = ssub.s32 %s42, %s49
      %p289 = scmp.eq.s32.totalorder %s288, 0
      %s291 = sadd.s32 %s290, 1
      %s292 = scalar_select %p289, %s290, %s291
      %p295 = pneg %p289
      %p296 = scmp.eq.s32.totalorder %s34, 3
      %p297 = por %p295, %p296
      %p298 = scmp.ne.s32.totalorder %s290, %s293
      %p299 = scmp.eq.s32.totalorder %s34, 0
      %p300 = por %p298, %p299
      %p301 = scmp.ne.s32.totalorder %s290, %s293
      %p302 = scmp.eq.s32.totalorder %s39, 3
      %p303 = por %p301, %p302
      %p304 = scmp.ne.s32.totalorder %s293, %s294
      %p305 = scmp.eq.s32.totalorder %s39, 0
      %p306 = por %p304, %p305
      %p307 = scmp.ne.s32.totalorder %s293, %s294
      %p308 = scmp.eq.s32.totalorder %s40, 3
      %p309 = por %p307, %p308
      %p311 = scmp.ne.s32.totalorder %s294, %s310
      %p312 = scmp.eq.s32.totalorder %s40, 0
      %p313 = por %p311, %p312
      %s314 = ssub.s32 %s42, %s49
      %p315 = scmp.eq.s32.totalorder %s314, 0
      %s317 = sadd.s32 %s316, 1
      %s318 = scalar_select %p315, %s316, %s317
      %p321 = pneg %p315
      %p322 = scmp.eq.s32.totalorder %s34, 3
      %p323 = por %p321, %p322
      %p324 = scmp.ne.s32.totalorder %s316, %s319
      %p325 = scmp.eq.s32.totalorder %s34, 0
      %p326 = por %p324, %p325
      %p327 = scmp.ne.s32.totalorder %s316, %s319
      %p328 = scmp.eq.s32.totalorder %s39, 3
      %p329 = por %p327, %p328
      %p330 = scmp.ne.s32.totalorder %s319, %s320
      %p331 = scmp.eq.s32.totalorder %s39, 0
      %p332 = por %p330, %p331
      %p333 = scmp.ne.s32.totalorder %s319, %s320
      %p334 = scmp.eq.s32.totalorder %s40, 3
      %p335 = por %p333, %p334
      %p337 = scmp.ne.s32.totalorder %s320, %s336
      %p338 = scmp.eq.s32.totalorder %s40, 0
      %p339 = por %p337, %p338
      %s340 = ssub.s32 %s42, %s49
      %p341 = scmp.eq.s32.totalorder %s340, 0
      %s343 = sadd.s32 %s342, 1
      %s344 = scalar_select %p341, %s342, %s343
      %p347 = pneg %p341
      %p348 = scmp.eq.s32.totalorder %s34, 3
      %p349 = por %p347, %p348
      %p350 = scmp.ne.s32.totalorder %s342, %s345
      %p351 = scmp.eq.s32.totalorder %s34, 0
      %p352 = por %p350, %p351
      %p353 = scmp.ne.s32.totalorder %s342, %s345
      %p354 = scmp.eq.s32.totalorder %s39, 3
      %p355 = por %p353, %p354
      %p356 = scmp.ne.s32.totalorder %s345, %s346
      %p357 = scmp.eq.s32.totalorder %s39, 0
      %p358 = por %p356, %p357
      %p359 = scmp.ne.s32.totalorder %s345, %s346
      %p360 = scmp.eq.s32.totalorder %s40, 3
      %p361 = por %p359, %p360
      %p363 = scmp.ne.s32.totalorder %s346, %s362
      %p364 = scmp.eq.s32.totalorder %s40, 0
      %p365 = por %p363, %p364
      %s366 = ssub.s32 %s42, %s49
      %p367 = scmp.eq.s32.totalorder %s366, 0
      %s369 = sadd.s32 %s368, 1
      %s370 = scalar_select %p367, %s368, %s369
      %p373 = pneg %p367
      %p374 = scmp.eq.s32.totalorder %s34, 3
      %p375 = por %p373, %p374
      %p376 = scmp.ne.s32.totalorder %s368, %s371
      %p377 = scmp.eq.s32.totalorder %s34, 0
      %p378 = por %p376, %p377
      %p379 = scmp.ne.s32.totalorder %s368, %s371
      %p380 = scmp.eq.s32.totalorder %s39, 3
      %p381 = por %p379, %p380
      %p382 = scmp.ne.s32.totalorder %s371, %s372
      %p383 = scmp.eq.s32.totalorder %s39, 0
      %p384 = por %p382, %p383
      %p385 = scmp.ne.s32.totalorder %s371, %s372
      %p386 = scmp.eq.s32.totalorder %s40, 3
      %p387 = por %p385, %p386
      %p389 = scmp.ne.s32.totalorder %s372, %s388
      %p390 = scmp.eq.s32.totalorder %s40, 0
      %p391 = por %p389, %p390
      %s392 = ssub.s32 %s42, %s49
      %p393 = scmp.eq.s32.totalorder %s392, 0
      %s395 = sadd.s32 %s394, 1
      %s396 = scalar_select %p393, %s394, %s395
      %p399 = pneg %p393
      %p400 = scmp.eq.s32.totalorder %s34, 3
      %p401 = por %p399, %p400
      %p402 = scmp.ne.s32.totalorder %s394, %s397
      %p403 = scmp.eq.s32.totalorder %s34, 0
      %p404 = por %p402, %p403
      %p405 = scmp.ne.s32.totalorder %s394, %s397
      %p406 = scmp.eq.s32.totalorder %s39, 3
      %p407 = por %p405, %p406
      %p408 = scmp.ne.s32.totalorder %s397, %s398
      %p409 = scmp.eq.s32.totalorder %s39, 0
      %p410 = por %p408, %p409
      %p411 = scmp.ne.s32.totalorder %s397, %s398
      %p412 = scmp.eq.s32.totalorder %s40, 3
      %p413 = por %p411, %p412
      %p415 = scmp.ne.s32.totalorder %s398, %s414
      %p416 = scmp.eq.s32.totalorder %s40, 0
      %p417 = por %p415, %p416
      %s419 = sadd.s32 %s418, 1
      %p422 = scmp.eq.s32.totalorder %s34, 3
      %p423 = scmp.ne.s32.totalorder %s418, %s420
      %p424 = scmp.eq.s32.totalorder %s34, 0
      %p425 = por %p423, %p424
      %p426 = scmp.ne.s32.totalorder %s418, %s420
      %p427 = scmp.eq.s32.totalorder %s39, 3
      %p428 = por %p426, %p427
      %p429 = scmp.ne.s32.totalorder %s420, %s421
      %p430 = scmp.eq.s32.totalorder %s39, 0
      %p431 = por %p429, %p430
      %p432 = scmp.ne.s32.totalorder %s420, %s421
      %p433 = scmp.eq.s32.totalorder %s40, 3
      %p434 = por %p432, %p433
      %p436 = scmp.ne.s32.totalorder %s421, %s435
      %p437 = scmp.eq.s32.totalorder %s40, 0
      %p438 = por %p436, %p437
      %s440 = sadd.s32 %s439, 1
      %p443 = scmp.eq.s32.totalorder %s34, 3
      %p444 = scmp.ne.s32.totalorder %s439, %s441
      %p445 = scmp.eq.s32.totalorder %s34, 0
      %p446 = por %p444, %p445
      %p447 = scmp.ne.s32.totalorder %s439, %s441
      %p448 = scmp.eq.s32.totalorder %s39, 3
      %p449 = por %p447, %p448
      %p450 = scmp.ne.s32.totalorder %s441, %s442
      %p451 = scmp.eq.s32.totalorder %s39, 0
      %p452 = por %p450, %p451
      %p453 = scmp.ne.s32.totalorder %s441, %s442
      %p454 = scmp.eq.s32.totalorder %s40, 3
      %p455 = por %p453, %p454
      %p457 = scmp.ne.s32.totalorder %s442, %s456
      %p458 = scmp.eq.s32.totalorder %s40, 0
      %p459 = por %p457, %p458
      %s460 = ssub.s32 %s41, %s53
      %p461 = scmp.eq.s32.totalorder %s460, 0
      %s463 = sadd.s32 %s462, 1
      %s464 = scalar_select %p461, %s462, %s463
      %p467 = pneg %p461
      %p468 = scmp.eq.s32.totalorder %s34, 3
      %p469 = por %p467, %p468
      %p470 = scmp.ne.s32.totalorder %s462, %s465
      %p471 = scmp.eq.s32.totalorder %s34, 0
      %p472 = por %p470, %p471
      %p473 = scmp.ne.s32.totalorder %s462, %s465
      %p474 = scmp.eq.s32.totalorder %s39, 3
      %p475 = por %p473, %p474
      %p476 = scmp.ne.s32.totalorder %s465, %s466
      %p477 = scmp.eq.s32.totalorder %s39, 0
      %p478 = por %p476, %p477
      %p479 = scmp.ne.s32.totalorder %s465, %s466
      %p480 = scmp.eq.s32.totalorder %s40, 3
      %p481 = por %p479, %p480
      %p483 = scmp.ne.s32.totalorder %s466, %s482
      %p484 = scmp.eq.s32.totalorder %s40, 0
      %p485 = por %p483, %p484
      %p486 = scmp.le.s32.totalorder 1, %s34
      %p487 = scmp.lt.s32.totalorder %s34, 5
      %p488 = pnand %p486, %p487
      %p489 = pneg %p488
      // Predicated region
      $region9: #{tpu_custom_call.1} parent=5 // pred_check
        _
      $region10: #{tpu_custom_call.1} parent=5 // pred_check_branch
        %491 = sbr.rel (%p488) target = $region12
      $region11: #{tpu_custom_call.1} parent=5 // pred_region
        %s492 = ssub.s32 %s34, 1
        // Predicated region
        $region13: #{tpu_custom_call.1} parent=11 // pred_check
          %p493 = pneg %p431
        $region14: #{tpu_custom_call.1} parent=11 // pred_check_branch
          %495 = sbr.rel (%p493) target = $region16
        $region15: #{tpu_custom_call.1} parent=11 // pred_region
          _
        $region16: #{tpu_custom_call.1} parent=11 // pred_fallthru
          _
        // Predicated region
        $region17: #{tpu_custom_call.1} parent=11 // pred_check
          %p496 = pneg %p452
        $region18: #{tpu_custom_call.1} parent=11 // pred_check_branch
          %498 = sbr.rel (%p496) target = $region20
        $region19: #{tpu_custom_call.1} parent=11 // pred_region
          _
        $region20: #{tpu_custom_call.1} parent=11 // pred_fallthru
          _
      $region12: #{tpu_custom_call.1} parent=5 // pred_fallthru
        _
      %p499 = scmp.lt.s32.totalorder %s34, 4
      // Predicated region
      $region21: #{tpu_custom_call.1} parent=5 // pred_check
        %p500 = pneg %p499
      $region22: #{tpu_custom_call.1} parent=5 // pred_check_branch
        %502 = sbr.rel (%p500) target = $region24
      $region23: #{tpu_custom_call.1} parent=5 // pred_region
        // Predicated region
        $region25: #{tpu_custom_call.1} parent=23 // pred_check
          %p503 = pneg %p66
        $region26: #{tpu_custom_call.1} parent=23 // pred_check_branch
          %505 = sbr.rel (%p503) target = $region28
        $region27: #{tpu_custom_call.1} parent=23 // pred_region
          %s506 = sand.u32 %s56, 1
          %s507 = scalar_lea.sflag [#allocation4], %s506
          %s508 = sand.u32 %s56, 1
          %s509 = smul.addr %s508, 8
          %s510 = scalar_lea.vmem [#allocation3], %s509
          %512 = vsyncadd %s507, 0
          %s513 = smul.addr %s41, 8
          %s514 = scalar_lea.hbm %s0, %s513
          %s516 = sshll.u32 %s514, 4
          %s517 = int_to_ptr.hbm [resolvable:$true] %s516
          %s518 = sshll.u32 %s510, 4
          %s519 = int_to_ptr.vmem [resolvable:$true] %s518
          %521 = dma.hbm_to_vmem [thread:$0]  %s517, 128, %s519, %s507
        $region28: #{tpu_custom_call.1} parent=23 // pred_fallthru
          _
        // Predicated region
        $region29: #{tpu_custom_call.1} parent=23 // pred_check
          %p522 = pneg %p92
        $region30: #{tpu_custom_call.1} parent=23 // pred_check_branch
          %524 = sbr.rel (%p522) target = $region32
        $region31: #{tpu_custom_call.1} parent=23 // pred_region
          %s525 = sand.u32 %s34, 1
          %s526 = scalar_lea.sflag [#allocation7], %s525
          %s527 = sand.u32 %s82, 1
          %s528 = scalar_lea.vmem [#allocation6], %s527
          %530 = vsyncadd %s526, 0
          %s531 = scalar_lea.hbm %s1, %s41
          %s533 = sshll.u32 %s531, 4
          %s534 = int_to_ptr.hbm [resolvable:$true] %s533
          %s535 = sshll.u32 %s528, 4
          %s536 = int_to_ptr.vmem [resolvable:$true] %s535
          %538 = dma.hbm_to_vmem [thread:$0]  %s534, 16, %s536, %s526
        $region32: #{tpu_custom_call.1} parent=23 // pred_fallthru
          _
        // Predicated region
        $region33: #{tpu_custom_call.1} parent=23 // pred_check
          %p539 = pneg %p118
        $region34: #{tpu_custom_call.1} parent=23 // pred_check_branch
          %541 = sbr.rel (%p539) target = $region36
        $region35: #{tpu_custom_call.1} parent=23 // pred_region
          %s542 = sand.u32 %s34, 1
          %s543 = scalar_lea.sflag [#allocation7], %s542
          %s544 = sand.u32 %s108, 1
          %s545 = scalar_lea.vmem [#allocation8], %s544
          %547 = vsyncadd %s543, 0
          %s548 = scalar_lea.hbm %s2, %s42
          %s550 = sshll.u32 %s548, 4
          %s551 = int_to_ptr.hbm [resolvable:$true] %s550
          %s552 = sshll.u32 %s545, 4
          %s553 = int_to_ptr.vmem [resolvable:$true] %s552
          %555 = dma.hbm_to_vmem [thread:$0]  %s551, 16, %s553, %s543
        $region36: #{tpu_custom_call.1} parent=23 // pred_fallthru
          _
        // Predicated region
        $region37: #{tpu_custom_call.1} parent=23 // pred_check
          %p556 = pneg %p144
        $region38: #{tpu_custom_call.1} parent=23 // pred_check_branch
          %558 = sbr.rel (%p556) target = $region40
        $region39: #{tpu_custom_call.1} parent=23 // pred_region
          %s559 = sand.u32 %s34, 1
          %s560 = scalar_lea.sflag [#allocation10], %s559
          %s561 = sand.u32 %s134, 1
          %s562 = scalar_lea.vmem [#allocation9], %s561
          %564 = vsyncadd %s560, 0
          %s565 = scalar_lea.hbm %s3, %s42
          %s567 = sshll.u32 %s565, 4
          %s568 = int_to_ptr.hbm [resolvable:$true] %s567
          %s569 = sshll.u32 %s562, 4
          %s570 = int_to_ptr.vmem [resolvable:$true] %s569
          %572 = dma.hbm_to_vmem [thread:$0]  %s568, 16, %s570, %s560
        $region40: #{tpu_custom_call.1} parent=23 // pred_fallthru
          _
        // Predicated region
        $region41: #{tpu_custom_call.1} parent=23 // pred_check
          %p573 = pneg %p170
        $region42: #{tpu_custom_call.1} parent=23 // pred_check_branch
          %575 = sbr.rel (%p573) target = $region44
        $region43: #{tpu_custom_call.1} parent=23 // pred_region
          %p576 = scmp.lt.s32.totalorder %s42, 1
          %s577 = scalar_select %p576, %s42, 1
          %s578 = smul.addr %s577, 4
          %s579 = smul.addr %s578, 4
          %s580 = scalar_lea.vmem %s4, %s579
        $region44: #{tpu_custom_call.1} parent=23 // pred_fallthru
          _
        // Predicated region
        $region45: #{tpu_custom_call.1} parent=23 // pred_check
          %p581 = pneg %p196
        $region46: #{tpu_custom_call.1} parent=23 // pred_check_branch
          %583 = sbr.rel (%p581) target = $region48
        $region47: #{tpu_custom_call.1} parent=23 // pred_region
          %p584 = scmp.lt.s32.totalorder %s42, 1
          %s585 = scalar_select %p584, %s42, 1
          %s586 = scalar_lea.vmem %s5, %s585
        $region48: #{tpu_custom_call.1} parent=23 // pred_fallthru
          _
        // Predicated region
        $region49: #{tpu_custom_call.1} parent=23 // pred_check
          %p587 = pneg %p222
        $region50: #{tpu_custom_call.1} parent=23 // pred_check_branch
          %589 = sbr.rel (%p587) target = $region52
        $region51: #{tpu_custom_call.1} parent=23 // pred_region
          %p590 = scmp.lt.s32.totalorder %s42, 1
          %s591 = scalar_select %p590, %s42, 1
          %s592 = smul.addr %s591, 4
          %s593 = smul.addr %s592, 4
          %s594 = scalar_lea.vmem %s6, %s593
        $region52: #{tpu_custom_call.1} parent=23 // pred_fallthru
          _
        // Predicated region
        $region53: #{tpu_custom_call.1} parent=23 // pred_check
          %p595 = pneg %p248
        $region54: #{tpu_custom_call.1} parent=23 // pred_check_branch
          %597 = sbr.rel (%p595) target = $region56
        $region55: #{tpu_custom_call.1} parent=23 // pred_region
          %p598 = scmp.lt.s32.totalorder %s42, 1
          %s599 = scalar_select %p598, %s42, 1
          %s600 = scalar_lea.vmem %s7, %s599
        $region56: #{tpu_custom_call.1} parent=23 // pred_fallthru
          _
        // Predicated region
        $region57: #{tpu_custom_call.1} parent=23 // pred_check
          %p601 = pneg %p274
        $region58: #{tpu_custom_call.1} parent=23 // pred_check_branch
          %603 = sbr.rel (%p601) target = $region60
        $region59: #{tpu_custom_call.1} parent=23 // pred_region
          %p604 = scmp.lt.s32.totalorder %s42, 1
          %s605 = scalar_select %p604, %s42, 1
          %s606 = scalar_lea.vmem %s8, %s605
        $region60: #{tpu_custom_call.1} parent=23 // pred_fallthru
          _
        // Predicated region
        $region61: #{tpu_custom_call.1} parent=23 // pred_check
          %p607 = pneg %p300
        $region62: #{tpu_custom_call.1} parent=23 // pred_check_branch
          %609 = sbr.rel (%p607) target = $region64
        $region63: #{tpu_custom_call.1} parent=23 // pred_region
          %s610 = sand.u32 %s34, 1
          %s611 = scalar_lea.sflag [#allocation10], %s610
          %s612 = sand.u32 %s290, 1
          %s613 = scalar_lea.vmem [#allocation11], %s612
          %615 = vsyncadd %s611, 0
          %s616 = scalar_lea.hbm %s9, %s42
          %s618 = sshll.u32 %s616, 4
          %s619 = int_to_ptr.hbm [resolvable:$true] %s618
          %s620 = sshll.u32 %s613, 4
          %s621 = int_to_ptr.vmem [resolvable:$true] %s620
          %623 = dma.hbm_to_vmem [thread:$0]  %s619, 16, %s621, %s611
        $region64: #{tpu_custom_call.1} parent=23 // pred_fallthru
          _
        // Predicated region
        $region65: #{tpu_custom_call.1} parent=23 // pred_check
          %p624 = pneg %p326
        $region66: #{tpu_custom_call.1} parent=23 // pred_check_branch
          %626 = sbr.rel (%p624) target = $region68
        $region67: #{tpu_custom_call.1} parent=23 // pred_region
          %p627 = scmp.lt.s32.totalorder %s42, 1
          %s628 = scalar_select %p627, %s42, 1
          %s629 = smul.addr %s628, 4
          %s630 = smul.addr %s629, 4
          %s631 = scalar_lea.vmem %s10, %s630
        $region68: #{tpu_custom_call.1} parent=23 // pred_fallthru
          _
        // Predicated region
        $region69: #{tpu_custom_call.1} parent=23 // pred_check
          %p632 = pneg %p352
        $region70: #{tpu_custom_call.1} parent=23 // pred_check_branch
          %634 = sbr.rel (%p632) target = $region72
        $region71: #{tpu_custom_call.1} parent=23 // pred_region
          %p635 = scmp.lt.s32.totalorder %s42, 1
          %s636 = scalar_select %p635, %s42, 1
          %s637 = scalar_lea.vmem %s11, %s636
        $region72: #{tpu_custom_call.1} parent=23 // pred_fallthru
          _
        // Predicated region
        $region73: #{tpu_custom_call.1} parent=23 // pred_check
          %p638 = pneg %p378
        $region74: #{tpu_custom_call.1} parent=23 // pred_check_branch
          %640 = sbr.rel (%p638) target = $region76
        $region75: #{tpu_custom_call.1} parent=23 // pred_region
          %p641 = scmp.lt.s32.totalorder %s42, 1
          %s642 = scalar_select %p641, %s42, 1
          %s643 = smul.addr %s642, 8
          %s644 = smul.addr %s643, 4
          %s645 = scalar_lea.vmem %s12, %s644
        $region76: #{tpu_custom_call.1} parent=23 // pred_fallthru
          _
        // Predicated region
        $region77: #{tpu_custom_call.1} parent=23 // pred_check
          %p646 = pneg %p404
        $region78: #{tpu_custom_call.1} parent=23 // pred_check_branch
          %648 = sbr.rel (%p646) target = $region80
        $region79: #{tpu_custom_call.1} parent=23 // pred_region
          %p649 = scmp.lt.s32.totalorder %s42, 1
          %s650 = scalar_select %p649, %s42, 1
          %s651 = scalar_lea.vmem %s13, %s650
        $region80: #{tpu_custom_call.1} parent=23 // pred_fallthru
          _
      $region24: #{tpu_custom_call.1} parent=5 // pred_fallthru
        _
      %p652 = scmp.le.s32.totalorder 1, %s34
      %p653 = scmp.lt.s32.totalorder %s34, 5
      %p654 = pnand %p652, %p653
      %p655 = pneg %p654
      // Predicated region
      $region81: #{tpu_custom_call.1} parent=5 // pred_check
        _
      $region82: #{tpu_custom_call.1} parent=5 // pred_check_branch
        %657 = sbr.rel (%p654) target = $region84
      $region83: #{tpu_custom_call.1} parent=5 // pred_region
        %s658 = ssub.s32 %s34, 1
        %s659 = sand.u32 %s59, 1
        %s660 = scalar_lea.sflag [#allocation4], %s659
        %s661 = sand.u32 %s59, 1
        %s662 = smul.addr %s661, 8
        %s663 = scalar_lea.vmem [#allocation3], %s662
        // Predicated region
        $region85: #{tpu_custom_call.1} parent=83 // pred_check
          %p664 = pneg %p72
        $region86: #{tpu_custom_call.1} parent=83 // pred_check_branch
          %666 = sbr.rel (%p664) target = $region88
        $region87: #{tpu_custom_call.1} parent=83 // pred_region
          %668 = dma.done %s660, 128
        $region88: #{tpu_custom_call.1} parent=83 // pred_fallthru
          _
        %s669 = sand.u32 %s39, 1
        %s670 = scalar_lea.sflag [#allocation7], %s669
        %s671 = sand.u32 %s85, 1
        %s672 = scalar_lea.vmem [#allocation6], %s671
        // Predicated region
        $region89: #{tpu_custom_call.1} parent=83 // pred_check
          %p673 = pneg %p98
        $region90: #{tpu_custom_call.1} parent=83 // pred_check_branch
          %675 = sbr.rel (%p673) target = $region92
        $region91: #{tpu_custom_call.1} parent=83 // pred_region
          %677 = dma.done %s670, 16
        $region92: #{tpu_custom_call.1} parent=83 // pred_fallthru
          _
        %s678 = sand.u32 %s39, 1
        %s679 = scalar_lea.sflag [#allocation7], %s678
        %s680 = sand.u32 %s111, 1
        %s681 = scalar_lea.vmem [#allocation8], %s680
        // Predicated region
        $region93: #{tpu_custom_call.1} parent=83 // pred_check
          %p682 = pneg %p124
        $region94: #{tpu_custom_call.1} parent=83 // pred_check_branch
          %684 = sbr.rel (%p682) target = $region96
        $region95: #{tpu_custom_call.1} parent=83 // pred_region
          %686 = dma.done %s679, 16
        $region96: #{tpu_custom_call.1} parent=83 // pred_fallthru
          _
        %s687 = sand.u32 %s39, 1
        %s688 = scalar_lea.sflag [#allocation10], %s687
        %s689 = sand.u32 %s137, 1
        %s690 = scalar_lea.vmem [#allocation9], %s689
        // Predicated region
        $region97: #{tpu_custom_call.1} parent=83 // pred_check
          %p691 = pneg %p150
        $region98: #{tpu_custom_call.1} parent=83 // pred_check_branch
          %693 = sbr.rel (%p691) target = $region100
        $region99: #{tpu_custom_call.1} parent=83 // pred_region
          %695 = dma.done %s688, 16
        $region100: #{tpu_custom_call.1} parent=83 // pred_fallthru
          _
        %s696 = sand.u32 %s39, 1
        %s697 = scalar_lea.sflag [#allocation10], %s696
        %s698 = sand.u32 %s293, 1
        %s699 = scalar_lea.vmem [#allocation11], %s698
        // Predicated region
        $region101: #{tpu_custom_call.1} parent=83 // pred_check
          %p700 = pneg %p306
        $region102: #{tpu_custom_call.1} parent=83 // pred_check_branch
          %702 = sbr.rel (%p700) target = $region104
        $region103: #{tpu_custom_call.1} parent=83 // pred_region
          %704 = dma.done %s697, 16
        $region104: #{tpu_custom_call.1} parent=83 // pred_fallthru
          _
        %s705 = sand.u32 %s59, 1
        %s706 = scalar_lea.sflag [#allocation4], %s705
        %s707 = sand.u32 %s59, 1
        %s708 = smul.addr %s707, 8
        %s709 = scalar_lea.vmem [#allocation3], %s708
        %p710 = pneg %p72
        %p711 = pneg %p69
        %s712 = sand.u32 %s39, 1
        %s713 = scalar_lea.sflag [#allocation7], %s712
        %s714 = sand.u32 %s85, 1
        %s715 = scalar_lea.vmem [#allocation6], %s714
        %p716 = pneg %p98
        %p717 = pneg %p95
        %s718 = sand.u32 %s39, 1
        %s719 = scalar_lea.sflag [#allocation7], %s718
        %s720 = sand.u32 %s111, 1
        %s721 = scalar_lea.vmem [#allocation8], %s720
        %p722 = pneg %p124
        %p723 = pneg %p121
        %s724 = sand.u32 %s39, 1
        %s725 = scalar_lea.sflag [#allocation10], %s724
        %s726 = sand.u32 %s137, 1
        %s727 = scalar_lea.vmem [#allocation9], %s726
        %p728 = pneg %p150
        %p729 = pneg %p147
        %p730 = scmp.lt.s32.totalorder %s44, 1
        %s731 = scalar_select %p730, %s44, 1
        %s732 = smul.addr %s731, 4
        %s733 = smul.addr %s732, 4
        %s734 = scalar_lea.vmem %s4, %s733
        %p735 = pneg %p176
        %p736 = pneg %p173
        %p737 = scmp.lt.s32.totalorder %s44, 1
        %s738 = scalar_select %p737, %s44, 1
        %s739 = scalar_lea.vmem %s5, %s738
        %p740 = pneg %p202
        %p741 = pneg %p199
        %p742 = scmp.lt.s32.totalorder %s44, 1
        %s743 = scalar_select %p742, %s44, 1
        %s744 = smul.addr %s743, 4
        %s745 = smul.addr %s744, 4
        %s746 = scalar_lea.vmem %s6, %s745
        %p747 = pneg %p228
        %p748 = pneg %p225
        %p749 = scmp.lt.s32.totalorder %s44, 1
        %s750 = scalar_select %p749, %s44, 1
        %s751 = scalar_lea.vmem %s7, %s750
        %p752 = pneg %p254
        %p753 = pneg %p251
        %p754 = scmp.lt.s32.totalorder %s44, 1
        %s755 = scalar_select %p754, %s44, 1
        %s756 = scalar_lea.vmem %s8, %s755
        %p757 = pneg %p280
        %p758 = pneg %p277
        %s759 = sand.u32 %s39, 1
        %s760 = scalar_lea.sflag [#allocation10], %s759
        %s761 = sand.u32 %s293, 1
        %s762 = scalar_lea.vmem [#allocation11], %s761
        %p763 = pneg %p306
        %p764 = pneg %p303
        %p765 = scmp.lt.s32.totalorder %s44, 1
        %s766 = scalar_select %p765, %s44, 1
        %s767 = smul.addr %s766, 4
        %s768 = smul.addr %s767, 4
        %s769 = scalar_lea.vmem %s10, %s768
        %p770 = pneg %p332
        %p771 = pneg %p329
        %p772 = scmp.lt.s32.totalorder %s44, 1
        %s773 = scalar_select %p772, %s44, 1
        %s774 = scalar_lea.vmem %s11, %s773
        %p775 = pneg %p358
        %p776 = pneg %p355
        %p777 = scmp.lt.s32.totalorder %s44, 1
        %s778 = scalar_select %p777, %s44, 1
        %s779 = smul.addr %s778, 8
        %s780 = smul.addr %s779, 4
        %s781 = scalar_lea.vmem %s12, %s780
        %p782 = pneg %p384
        %p783 = pneg %p381
        %p784 = scmp.lt.s32.totalorder %s44, 1
        %s785 = scalar_select %p784, %s44, 1
        %s786 = scalar_lea.vmem %s13, %s785
        %p787 = pneg %p410
        %p788 = pneg %p407
        %p789 = pneg %p431
        %p790 = pneg %p428
        %p791 = pneg %p452
        %p792 = pneg %p449
        %p793 = pneg %p478
        %p794 = pneg %p475
        %s795 = sand.u32 %s465, 1
        %s796 = scalar_lea.sflag [#allocation5], %s795
        %s797 = sand.u32 %s465, 1
        %s798 = smul.addr %s797, 8
        %s799 = scalar_lea.vmem [#allocation12], %s798
        %p800 = scmp.lt.s32.totalorder %s44, 1
        %s801 = scalar_select %p800, %s44, 1
        %s802 = smul.addr %s801, 4
        %s803 = smul.addr %s802, 4
        %s804 = scalar_lea.vmem %s4, %s803
        %p805 = scmp.lt.s32.totalorder %s44, 1
        %s806 = scalar_select %p805, %s44, 1
        %s807 = scalar_lea.vmem %s5, %s806
        %p808 = scmp.lt.s32.totalorder %s44, 1
        %s809 = scalar_select %p808, %s44, 1
        %s810 = smul.addr %s809, 4
        %s811 = smul.addr %s810, 4
        %s812 = scalar_lea.vmem %s6, %s811
        %p813 = scmp.lt.s32.totalorder %s44, 1
        %s814 = scalar_select %p813, %s44, 1
        %s815 = scalar_lea.vmem %s7, %s814
        %p816 = scmp.lt.s32.totalorder %s44, 1
        %s817 = scalar_select %p816, %s44, 1
        %s818 = scalar_lea.vmem %s8, %s817
        %p819 = scmp.lt.s32.totalorder %s44, 1
        %s820 = scalar_select %p819, %s44, 1
        %s821 = smul.addr %s820, 4
        %s822 = smul.addr %s821, 4
        %s823 = scalar_lea.vmem %s10, %s822
        %p824 = scmp.lt.s32.totalorder %s44, 1
        %s825 = scalar_select %p824, %s44, 1
        %s826 = scalar_lea.vmem %s11, %s825
        %p827 = scmp.lt.s32.totalorder %s44, 1
        %s828 = scalar_select %p827, %s44, 1
        %s829 = smul.addr %s828, 8
        %s830 = smul.addr %s829, 4
        %s831 = scalar_lea.vmem %s12, %s830
        %p832 = scmp.lt.s32.totalorder %s44, 1
        %s833 = scalar_select %p832, %s44, 1
        %s834 = scalar_lea.vmem %s13, %s833
        %p836 = scmp.eq.s32.totalorder %s44, 0
        // Predicated region
        $region105: #{tpu_custom_call.1} parent=83 // pred_check
          %p837 = pneg %p836
        $region106: #{tpu_custom_call.1} parent=83 // pred_check_branch
          %839 = sbr.rel (%p837) target = $region108
        $region107: #{tpu_custom_call.1} parent=83 // pred_region
          %v840 = vld [vmem:[%s663] sm:$0xff]
          %vm841 = vcmask 261120
          %842 = vst.msk [vmem:[#allocation2] sm:$0xff] %vm841, %v840
        $region108: #{tpu_custom_call.1} parent=83 // pred_fallthru
          _
        %v843 = vld [vmem:[#allocation2] sm:$0xff]
        %v844 = vld [vmem:[%s681] sm:$0x1]
        %v845 = vld [vmem:[%s690] sm:$0x1]
        %vm846 = vcmask 261120
        %v847 = vsel %vm846, %v843, 0.0
        %848 = vadd.xlane.f32.xlu0 %v847
        %v849 = vpop.xlane.xlu0 %848
        %v850 = vrcp.pop 32.0
        %v851 = vmul.f32 32.0, %v850
        %v852 = vsub.f32 1.0, %v851
        %v853 = vmul.f32 %v850, %v852
        %v854 = vadd.f32 %v850, %v853
        %vm855 = vweird.f32 %v850
        %v856 = vsel %vm855, %v850, %v854
        %v857 = vmul.f32 %v849, %v856
        %v858 = vsub.f32 %v843, %v857
        %v859 = vmul.f32 %v858, %v858
        %v860 = vsel %vm846, %v859, 0.0
        %861 = vadd.xlane.f32.xlu0 %v860
        %v862 = vpop.xlane.xlu0 %861
        %v863 = vmul.f32 %v862, %v856
        %v864 = vadd.f32 %v863, 1e-05
        %v865 = vrsqrt.pop %v864
        %v866 = vmul.f32 %v865, %v864
        %v867 = vmul.f32 %v866, %v865
        %v868 = vmul.f32 0.5, %v867
        %v869 = vsub.f32 1.5, %v868
        %v870 = vmul.f32 %v865, %v869
        %vm871 = vweird.f32 %v864
        %vm872 = vweird.f32 %v865
        %vm873 = vmor %vm871, %vm872
        %v874 = vsel %vm873, %v865, %v870
        %v875 = vmul.f32 %v858, %v874
        %v877 = vperm.slane %v844, 0
        %v879 = vmul.f32 %v875, %v877
        %v881 = vperm.slane %v845, 0
        %v883 = vadd.f32 %v879, %v881
        %v884 = vpack.c.bf16 %v883, %v883
        %v885 = vld [vmem:[%s804] sm:$0xf]
        %v886 = vld [vmem:[%s804 + $0x4] sm:$0xf]
        %v887 = vld [vmem:[%s804 + $0x8] sm:$0xf]
        %v888 = vld [vmem:[%s804 + $0xc] sm:$0xf]
        %v889 = vld [vmem:[%s807] sm:$0x1]
        %v891 = vperm.slane %v889, 0
        %v897 = vunpack.c.l.b16 %v885
        %v898 = vunpack.c.l.b16 %v886
        %v899 = vunpack.c.l.b16 %v887
        %v900 = vunpack.c.l.b16 %v888
        %v901 = vpack.c.b16 %v898, %v897
        %v902 = vpack.c.b16 %v900, %v899
        %v906 = vsel %vm846, %v884, 0
        %908 = vmatpush.bf16.msra.mxu0 0
        %909 = vmatpush.bf16.msra.mxu0 0
        %910 = vmatpush.bf16.msra.mxu0 0
        %911 = vmatpush.bf16.msra.mxu0 0
        %912 = vmatpush.bf16.msra.mxu0 0
        %913 = vmatpush.bf16.msra.mxu0 0
        %914 = vmatpush.bf16.msra.mxu0 %v902
        %915 = vmatpush.bf16.msra.mxu0 %v901
        %916 = vmatmul.bf16.gmra.mxu0 %v906
        %v917 = vpop.f32.mrf.mxu0
        %v918 = vadd.f32 %v891, %v917
        %v919 = vpop.f32.mrf.mxu0
        %920 = vdwg.mxu0
        %v921 = vld [vmem:[%s672] sm:$0x1]
        %v922 = vpack.c.bf16 %v918, %v918
        %v924 = vperm.slane %v921, 0
        %927 = vrot.lane.b32.xlu0 %v922, 96
        %v928 = vpop.permute.xlu0 %927
        %vm929 = vcmask 64512
        %v931 = vsel %vm929, %v922, 0
        %v934 = vsel %vm929, %v928, 0
        %936 = vmatpush.bf16.xpose.msra.mxu0 0
        %937 = vmatpush.bf16.xpose.msra.mxu0 0
        %938 = vmatpush.bf16.xpose.msra.mxu0 0
        %939 = vmatpush.bf16.xpose.msra.mxu0 0
        %940 = vmatpush.bf16.xpose.msra.mxu0 0
        %941 = vmatpush.bf16.xpose.msra.mxu0 0
        %942 = vmatpush.bf16.xpose.msra.mxu0 0
        %943 = vmatpush.bf16.xpose.msra.mxu0 %v934
        %944 = vmatmul.bf16.gmra.mxu0 %v931
        %v945 = vpop.f32.mrf.mxu0
        %v946 = vadd.f32 %v924, %v945
        %v947 = vpop.f32.mrf.mxu0
        %948 = vdwg.mxu0
        %v949 = vsel %vm929, %v946, -inf
        %950 = vmax.xlane.f32.xlu0 %v949
        %v951 = vpop.xlane.xlu0 %950
        %v952 = vsub.f32 %v946, %v951
        %v953 = vmul.f32 %v952, 1.442695
        %v954 = vpow.pop %v953
        %v955 = vsel %vm929, %v954, 0.0
        %956 = vadd.xlane.f32.xlu0 %v955
        %v957 = vpop.xlane.xlu0 %956
        %v958 = vrcp.pop %v957
        %v959 = vmul.f32 %v954, %v958
        %v960 = vpack.c.bf16 %v959, %v959
        %961 = vrot.lane.b32.xlu0 %v922, 64
        %v962 = vpop.permute.xlu0 %961
        %v964 = vsel %vm929, %v960, 0
        %vm966 = vcmask 1043456
        %v968 = vsel %vm966, %v962, 0
        %970 = vmatpush.bf16.msra.mxu0 0
        %971 = vmatpush.bf16.msra.mxu0 0
        %972 = vmatpush.bf16.msra.mxu0 0
        %973 = vmatpush.bf16.msra.mxu0 0
        %974 = vmatpush.bf16.msra.mxu0 0
        %975 = vmatpush.bf16.msra.mxu0 0
        %976 = vmatpush.bf16.msra.mxu0 0
        %977 = vmatpush.bf16.msra.mxu0 %v968
        %978 = vmatmul.bf16.gmra.mxu0 %v964
        %v979 = vpop.f32.mrf.mxu0
        %v980 = vadd.f32 0.0, %v979
        %v981 = vpop.f32.mrf.mxu0
        %982 = vdwg.mxu0
        %983 = vrot.lane.b32.xlu0 %v922, 120
        %v984 = vpop.permute.xlu0 %983
        %985 = vrot.lane.b32.xlu0 %v922, 88
        %v986 = vpop.permute.xlu0 %985
        %v988 = vsel %vm929, %v984, 0
        %v991 = vsel %vm929, %v986, 0
        %993 = vmatpush.bf16.xpose.msra.mxu0 0
        %994 = vmatpush.bf16.xpose.msra.mxu0 0
        %995 = vmatpush.bf16.xpose.msra.mxu0 0
        %996 = vmatpush.bf16.xpose.msra.mxu0 0
        %997 = vmatpush.bf16.xpose.msra.mxu0 0
        %998 = vmatpush.bf16.xpose.msra.mxu0 0
        %999 = vmatpush.bf16.xpose.msra.mxu0 0
        %1000 = vmatpush.bf16.xpose.msra.mxu0 %v991
        %1001 = vmatmul.bf16.gmra.mxu0 %v988
        %v1002 = vpop.f32.mrf.mxu0
        %v1003 = vadd.f32 %v924, %v1002
        %v1004 = vpop.f32.mrf.mxu0
        %1005 = vdwg.mxu0
        %v1006 = vsel %vm929, %v1003, -inf
        %1007 = vmax.xlane.f32.xlu0 %v1006
        %v1008 = vpop.xlane.xlu0 %1007
        %v1009 = vsub.f32 %v1003, %v1008
        %v1010 = vmul.f32 %v1009, 1.442695
        %v1011 = vpow.pop %v1010
        %v1012 = vsel %vm929, %v1011, 0.0
        %1013 = vadd.xlane.f32.xlu0 %v1012
        %v1014 = vpop.xlane.xlu0 %1013
        %v1015 = vrcp.pop %v1014
        %v1016 = vmul.f32 %v1011, %v1015
        %v1017 = vpack.c.bf16 %v1016, %v1016
        %1018 = vrot.lane.b32.xlu0 %v922, 56
        %v1019 = vpop.permute.xlu0 %1018
        %v1021 = vsel %vm929, %v1017, 0
        %v1024 = vsel %vm966, %v1019, 0
        %1026 = vmatpush.bf16.msra.mxu0 0
        %1027 = vmatpush.bf16.msra.mxu0 0
        %1028 = vmatpush.bf16.msra.mxu0 0
        %1029 = vmatpush.bf16.msra.mxu0 0
        %1030 = vmatpush.bf16.msra.mxu0 0
        %1031 = vmatpush.bf16.msra.mxu0 0
        %1032 = vmatpush.bf16.msra.mxu0 0
        %1033 = vmatpush.bf16.msra.mxu0 %v1024
        %1034 = vmatmul.bf16.gmra.mxu0 %v1021
        %v1035 = vpop.f32.mrf.mxu0
        %v1036 = vadd.f32 0.0, %v1035
        %v1037 = vpop.f32.mrf.mxu0
        %1038 = vdwg.mxu0
        %1039 = vrot.lane.b32.xlu0 %v922, 112
        %v1040 = vpop.permute.xlu0 %1039
        %1041 = vrot.lane.b32.xlu0 %v922, 80
        %v1042 = vpop.permute.xlu0 %1041
        %v1044 = vsel %vm929, %v1040, 0
        %v1047 = vsel %vm929, %v1042, 0
        %1049 = vmatpush.bf16.xpose.msra.mxu0 0
        %1050 = vmatpush.bf16.xpose.msra.mxu0 0
        %1051 = vmatpush.bf16.xpose.msra.mxu0 0
        %1052 = vmatpush.bf16.xpose.msra.mxu0 0
        %1053 = vmatpush.bf16.xpose.msra.mxu0 0
        %1054 = vmatpush.bf16.xpose.msra.mxu0 0
        %1055 = vmatpush.bf16.xpose.msra.mxu0 0
        %1056 = vmatpush.bf16.xpose.msra.mxu0 %v1047
        %1057 = vmatmul.bf16.gmra.mxu0 %v1044
        %v1058 = vpop.f32.mrf.mxu0
        %v1059 = vadd.f32 %v924, %v1058
        %v1060 = vpop.f32.mrf.mxu0
        %1061 = vdwg.mxu0
        %v1062 = vsel %vm929, %v1059, -inf
        %1063 = vmax.xlane.f32.xlu0 %v1062
        %v1064 = vpop.xlane.xlu0 %1063
        %v1065 = vsub.f32 %v1059, %v1064
        %v1066 = vmul.f32 %v1065, 1.442695
        %v1067 = vpow.pop %v1066
        %v1068 = vsel %vm929, %v1067, 0.0
        %1069 = vadd.xlane.f32.xlu0 %v1068
        %v1070 = vpop.xlane.xlu0 %1069
        %v1071 = vrcp.pop %v1070
        %v1072 = vmul.f32 %v1067, %v1071
        %v1073 = vpack.c.bf16 %v1072, %v1072
        %1074 = vrot.lane.b32.xlu0 %v922, 48
        %v1075 = vpop.permute.xlu0 %1074
        %v1077 = vsel %vm929, %v1073, 0
        %v1080 = vsel %vm966, %v1075, 0
        %1082 = vmatpush.bf16.msra.mxu0 0
        %1083 = vmatpush.bf16.msra.mxu0 0
        %1084 = vmatpush.bf16.msra.mxu0 0
        %1085 = vmatpush.bf16.msra.mxu0 0
        %1086 = vmatpush.bf16.msra.mxu0 0
        %1087 = vmatpush.bf16.msra.mxu0 0
        %1088 = vmatpush.bf16.msra.mxu0 0
        %1089 = vmatpush.bf16.msra.mxu0 %v1080
        %1090 = vmatmul.bf16.gmra.mxu0 %v1077
        %v1091 = vpop.f32.mrf.mxu0
        %v1092 = vadd.f32 0.0, %v1091
        %v1093 = vpop.f32.mrf.mxu0
        %1094 = vdwg.mxu0
        %1095 = vrot.lane.b32.xlu0 %v922, 104
        %v1096 = vpop.permute.xlu0 %1095
        %1097 = vrot.lane.b32.xlu0 %v922, 72
        %v1098 = vpop.permute.xlu0 %1097
        %v1100 = vsel %vm929, %v1096, 0
        %v1103 = vsel %vm929, %v1098, 0
        %1105 = vmatpush.bf16.xpose.msra.mxu0 0
        %1106 = vmatpush.bf16.xpose.msra.mxu0 0
        %1107 = vmatpush.bf16.xpose.msra.mxu0 0
        %1108 = vmatpush.bf16.xpose.msra.mxu0 0
        %1109 = vmatpush.bf16.xpose.msra.mxu0 0
        %1110 = vmatpush.bf16.xpose.msra.mxu0 0
        %1111 = vmatpush.bf16.xpose.msra.mxu0 0
        %1112 = vmatpush.bf16.xpose.msra.mxu0 %v1103
        %1113 = vmatmul.bf16.gmra.mxu0 %v1100
        %v1114 = vpop.f32.mrf.mxu0
        %v1115 = vadd.f32 %v924, %v1114
        %v1116 = vpop.f32.mrf.mxu0
        %1117 = vdwg.mxu0
        %v1118 = vsel %vm929, %v1115, -inf
        %1119 = vmax.xlane.f32.xlu0 %v1118
        %v1120 = vpop.xlane.xlu0 %1119
        %v1121 = vsub.f32 %v1115, %v1120
        %v1122 = vmul.f32 %v1121, 1.442695
        %v1123 = vpow.pop %v1122
        %v1124 = vsel %vm929, %v1123, 0.0
        %1125 = vadd.xlane.f32.xlu0 %v1124
        %v1126 = vpop.xlane.xlu0 %1125
        %v1127 = vrcp.pop %v1126
        %v1128 = vmul.f32 %v1123, %v1127
        %v1129 = vpack.c.bf16 %v1128, %v1128
        %1130 = vrot.lane.b32.xlu0 %v922, 40
        %v1131 = vpop.permute.xlu0 %1130
        %v1133 = vsel %vm929, %v1129, 0
        %v1136 = vsel %vm966, %v1131, 0
        %1138 = vmatpush.bf16.msra.mxu0 0
        %1139 = vmatpush.bf16.msra.mxu0 0
        %1140 = vmatpush.bf16.msra.mxu0 0
        %1141 = vmatpush.bf16.msra.mxu0 0
        %1142 = vmatpush.bf16.msra.mxu0 0
        %1143 = vmatpush.bf16.msra.mxu0 0
        %1144 = vmatpush.bf16.msra.mxu0 0
        %1145 = vmatpush.bf16.msra.mxu0 %v1136
        %1146 = vmatmul.bf16.gmra.mxu0 %v1133
        %v1147 = vpop.f32.mrf.mxu0
        %v1148 = vadd.f32 0.0, %v1147
        %v1149 = vpop.f32.mrf.mxu0
        %1150 = vdwg.mxu0
        %1152 = vrot.lane.b32.xlu0 %v1036, 8
        %v1153 = vpop.permute.xlu0 %1152
        %1156 = vrot.lane.b32.xlu0 %v1092, 16
        %v1157 = vpop.permute.xlu0 %1156
        %1160 = vrot.lane.b32.xlu0 %v1148, 24
        %v1161 = vpop.permute.xlu0 %1160
        %v1163 = vsel %vm929, %v980, %v1153
        %vm1164 = vcmask 130048
        %v1165 = vsel %vm1164, %v1163, %v1157
        %vm1166 = vcmask 195584
        %v1167 = vsel %vm1166, %v1165, %v1161
        %v1168 = vpack.c.bf16 %v1167, %v1167
        %v1169 = vld [vmem:[%s812] sm:$0xf]
        %v1170 = vld [vmem:[%s812 + $0x4] sm:$0xf]
        %v1171 = vld [vmem:[%s812 + $0x8] sm:$0xf]
        %v1172 = vld [vmem:[%s812 + $0xc] sm:$0xf]
        %v1173 = vld [vmem:[%s815] sm:$0x1]
        %v1175 = vperm.slane %v1173, 0
        %v1181 = vunpack.c.l.b16 %v1169
        %v1182 = vunpack.c.l.b16 %v1170
        %v1183 = vunpack.c.l.b16 %v1171
        %v1184 = vunpack.c.l.b16 %v1172
        %v1185 = vpack.c.b16 %v1182, %v1181
        %v1186 = vpack.c.b16 %v1184, %v1183
        %v1190 = vsel %vm846, %v1168, 0
        %1192 = vmatpush.bf16.msra.mxu0 0
        %1193 = vmatpush.bf16.msra.mxu0 0
        %1194 = vmatpush.bf16.msra.mxu0 0
        %1195 = vmatpush.bf16.msra.mxu0 0
        %1196 = vmatpush.bf16.msra.mxu0 0
        %1197 = vmatpush.bf16.msra.mxu0 0
        %1198 = vmatpush.bf16.msra.mxu0 %v1186
        %1199 = vmatpush.bf16.msra.mxu0 %v1185
        %1200 = vmatmul.bf16.gmra.mxu0 %v1190
        %v1201 = vpop.f32.mrf.mxu0
        %v1202 = vadd.f32 %v1175, %v1201
        %v1203 = vpop.f32.mrf.mxu0
        %1204 = vdwg.mxu0
        %v1205 = vadd.f32 %v843, %v1202
        %v1206 = vld [vmem:[%s818] sm:$0x1]
        %v1207 = vld [vmem:[%s699] sm:$0x1]
        %v1208 = vsel %vm846, %v1205, 0.0
        %1209 = vadd.xlane.f32.xlu0 %v1208
        %v1210 = vpop.xlane.xlu0 %1209
        %v1211 = vmul.f32 %v1210, %v856
        %v1212 = vsub.f32 %v1205, %v1211
        %v1213 = vmul.f32 %v1212, %v1212
        %v1214 = vsel %vm846, %v1213, 0.0
        %1215 = vadd.xlane.f32.xlu0 %v1214
        %v1216 = vpop.xlane.xlu0 %1215
        %v1217 = vmul.f32 %v1216, %v856
        %v1218 = vadd.f32 %v1217, 1e-05
        %v1219 = vrsqrt.pop %v1218
        %v1220 = vmul.f32 %v1219, %v1218
        %v1221 = vmul.f32 %v1220, %v1219
        %v1222 = vmul.f32 0.5, %v1221
        %v1223 = vsub.f32 1.5, %v1222
        %v1224 = vmul.f32 %v1219, %v1223
        %vm1225 = vweird.f32 %v1218
        %vm1226 = vweird.f32 %v1219
        %vm1227 = vmor %vm1225, %vm1226
        %v1228 = vsel %vm1227, %v1219, %v1224
        %v1229 = vmul.f32 %v1212, %v1228
        %v1231 = vperm.slane %v1206, 0
        %v1233 = vmul.f32 %v1229, %v1231
        %v1235 = vperm.slane %v1207, 0
        %v1237 = vadd.f32 %v1233, %v1235
        %v1238 = vpack.c.bf16 %v1237, %v1237
        %v1239 = vld [vmem:[%s823] sm:$0xf]
        %v1240 = vld [vmem:[%s823 + $0x4] sm:$0xf]
        %v1241 = vld [vmem:[%s823 + $0x8] sm:$0xf]
        %v1242 = vld [vmem:[%s823 + $0xc] sm:$0xf]
        %v1243 = vld [vmem:[%s826] sm:$0x1]
        %v1245 = vperm.slane %v1243, 0
        %v1251 = vunpack.c.l.b16 %v1239
        %v1252 = vunpack.c.l.b16 %v1240
        %v1253 = vunpack.c.l.b16 %v1241
        %v1254 = vunpack.c.l.b16 %v1242
        %v1255 = vpack.c.b16 %v1252, %v1251
        %v1256 = vpack.c.b16 %v1254, %v1253
        %v1260 = vsel %vm846, %v1238, 0
        %1262 = vmatpush.bf16.msra.mxu0 0
        %1263 = vmatpush.bf16.msra.mxu0 0
        %1264 = vmatpush.bf16.msra.mxu0 0
        %1265 = vmatpush.bf16.msra.mxu0 0
        %1266 = vmatpush.bf16.msra.mxu0 0
        %1267 = vmatpush.bf16.msra.mxu0 0
        %1268 = vmatpush.bf16.msra.mxu0 %v1256
        %1269 = vmatpush.bf16.msra.mxu0 %v1255
        %1270 = vmatmul.bf16.gmra.mxu0 %v1260
        %v1271 = vpop.f32.mrf.mxu0
        %v1272 = vadd.f32 %v1245, %v1271
        %v1273 = vpop.f32.mrf.mxu0
        %1274 = vdwg.mxu0
        %v1275 = vmax.f32 %v1272, 0.0
        %v1276 = vpack.c.bf16 %v1275, %v1275
        %v1277 = vld [vmem:[%s831] sm:$0xf]
        %v1278 = vld [vmem:[%s831 + $0x4] sm:$0xf]
        %v1279 = vld [vmem:[%s831 + $0x8] sm:$0xf]
        %v1280 = vld [vmem:[%s831 + $0xc] sm:$0xf]
        %v1281 = vld [vmem:[%s831 + $0x10] sm:$0xf]
        %v1282 = vld [vmem:[%s831 + $0x14] sm:$0xf]
        %v1283 = vld [vmem:[%s831 + $0x18] sm:$0xf]
        %v1284 = vld [vmem:[%s831 + $0x1c] sm:$0xf]
        %v1285 = vld [vmem:[%s834] sm:$0x1]
        %v1287 = vperm.slane %v1285, 0
        %v1297 = vunpack.c.l.b16 %v1277
        %v1298 = vunpack.c.l.b16 %v1278
        %v1299 = vunpack.c.l.b16 %v1279
        %v1300 = vunpack.c.l.b16 %v1280
        %v1301 = vunpack.c.l.b16 %v1281
        %v1302 = vunpack.c.l.b16 %v1282
        %v1303 = vunpack.c.l.b16 %v1283
        %v1304 = vunpack.c.l.b16 %v1284
        %v1305 = vpack.c.b16 %v1298, %v1297
        %v1306 = vpack.c.b16 %v1300, %v1299
        %v1307 = vpack.c.b16 %v1302, %v1301
        %v1308 = vpack.c.b16 %v1304, %v1303
        %vm1313 = vcmask 523264
        %v1315 = vsel %vm1313, %v1276, 0
        %1317 = vmatpush.bf16.msra.mxu0 0
        %1318 = vmatpush.bf16.msra.mxu0 0
        %1319 = vmatpush.bf16.msra.mxu0 0
        %1320 = vmatpush.bf16.msra.mxu0 0
        %1321 = vmatpush.bf16.msra.mxu0 %v1308
        %1322 = vmatpush.bf16.msra.mxu0 %v1307
        %1323 = vmatpush.bf16.msra.mxu0 %v1306
        %1324 = vmatpush.bf16.msra.mxu0 %v1305
        %1325 = vmatmul.bf16.gmra.mxu0 %v1315
        %v1326 = vpop.f32.mrf.mxu0
        %v1327 = vadd.f32 %v1287, %v1326
        %v1328 = vpop.f32.mrf.mxu0
        %1329 = vdwg.mxu0
        %v1330 = vadd.f32 %v1205, %v1327
        %1331 = vst.msk [vmem:[#allocation2] sm:$0xff] %vm846, %v1330
        %p1332 = scmp.eq.s32.totalorder %s44, 1
        // Predicated region
        $region109: #{tpu_custom_call.1} parent=83 // pred_check
          %p1333 = pneg %p1332
        $region110: #{tpu_custom_call.1} parent=83 // pred_check_branch
          %1335 = sbr.rel (%p1333) target = $region112
        $region111: #{tpu_custom_call.1} parent=83 // pred_region
          %v1336 = vld [vmem:[%s14] sm:$0x1]
          %v1337 = vld [vmem:[%s15] sm:$0x1]
          %v1338 = vsel %vm846, %v1330, 0.0
          %1339 = vadd.xlane.f32.xlu0 %v1338
          %v1340 = vpop.xlane.xlu0 %1339
          %v1341 = vmul.f32 %v1340, %v856
          %v1342 = vsub.f32 %v1330, %v1341
          %v1343 = vmul.f32 %v1342, %v1342
          %v1344 = vsel %vm846, %v1343, 0.0
          %1345 = vadd.xlane.f32.xlu0 %v1344
          %v1346 = vpop.xlane.xlu0 %1345
          %v1347 = vmul.f32 %v1346, %v856
          %v1348 = vadd.f32 %v1347, 1e-05
          %v1349 = vrsqrt.pop %v1348
          %v1350 = vmul.f32 %v1349, %v1348
          %v1351 = vmul.f32 %v1350, %v1349
          %v1352 = vmul.f32 0.5, %v1351
          %v1353 = vsub.f32 1.5, %v1352
          %v1354 = vmul.f32 %v1349, %v1353
          %vm1355 = vweird.f32 %v1348
          %vm1356 = vweird.f32 %v1349
          %vm1357 = vmor %vm1355, %vm1356
          %v1358 = vsel %vm1357, %v1349, %v1354
          %v1359 = vmul.f32 %v1342, %v1358
          %v1361 = vperm.slane %v1336, 0
          %v1363 = vmul.f32 %v1359, %v1361
          %v1365 = vperm.slane %v1337, 0
          %v1367 = vadd.f32 %v1363, %v1365
          %1368 = vst.msk [vmem:[%s799] sm:$0xff] %vm846, %v1367
        $region112: #{tpu_custom_call.1} parent=83 // pred_fallthru
          _
        %s1369 = sand.u32 %s465, 1
        %s1370 = scalar_lea.sflag [#allocation5], %s1369
        %s1371 = sand.u32 %s465, 1
        %s1372 = smul.addr %s1371, 8
        %s1373 = scalar_lea.vmem [#allocation12], %s1372
        // Predicated region
        $region113: #{tpu_custom_call.1} parent=83 // pred_check
          %p1374 = pneg %p475
        $region114: #{tpu_custom_call.1} parent=83 // pred_check_branch
          %1376 = sbr.rel (%p1374) target = $region116
        $region115: #{tpu_custom_call.1} parent=83 // pred_region
          %1378 = vsyncadd %s1370, 0
          %s1379 = smul.addr %s43, 8
          %s1380 = scalar_lea.hbm %s16, %s1379
          %s1382 = sshll.u32 %s1373, 4
          %s1383 = int_to_ptr.vmem [resolvable:$true] %s1382
          %s1384 = sshll.u32 %s1380, 4
          %s1385 = int_to_ptr.hbm [resolvable:$true] %s1384
          %1387 = dma.vmem_to_hbm [thread:$0]  %s1383, 128, %s1385, %s1370
        $region116: #{tpu_custom_call.1} parent=83 // pred_fallthru
          _
      $region84: #{tpu_custom_call.1} parent=5 // pred_fallthru
        _
      %p1388 = scmp.le.s32.totalorder 2, %s34
      // Predicated region
      $region117: #{tpu_custom_call.1} parent=5 // pred_check
        %p1389 = pneg %p1388
      $region118: #{tpu_custom_call.1} parent=5 // pred_check_branch
        %1391 = sbr.rel (%p1389) target = $region120
      $region119: #{tpu_custom_call.1} parent=5 // pred_region
        %s1392 = ssub.s32 %s34, 2
        // Predicated region
        $region121: #{tpu_custom_call.1} parent=119 // pred_check
          %p1393 = pneg %p481
        $region122: #{tpu_custom_call.1} parent=119 // pred_check_branch
          %1395 = sbr.rel (%p1393) target = $region124
        $region123: #{tpu_custom_call.1} parent=119 // pred_region
          %s1396 = sand.u32 %s466, 1
          %s1397 = scalar_lea.sflag [#allocation5], %s1396
          %s1398 = sand.u32 %s466, 1
          %s1399 = smul.addr %s1398, 8
          %s1400 = scalar_lea.vmem [#allocation12], %s1399
          %1402 = dma.done %s1397, 128
        $region124: #{tpu_custom_call.1} parent=119 // pred_fallthru
          _
      $region120: #{tpu_custom_call.1} parent=5 // pred_fallthru
        _
    $region6: #{tpu_custom_call.1} parent=1 // loop_footer
      %s38 = sadd.s32 1, %s34
    $region7: #{tpu_custom_call.1} parent=1 // loop_footer_branch
      %33 = sbr.rel target = $region3
    $region8: #{tpu_custom_call.1} parent=1 // loop_exit
      _
    %1403 = vsyncpa [#allocation4], 1
    %s1404 = scalar_lea.sflag [#allocation4], 1
    %1405 = vsyncpa %s1404, 1
    %1406 = vsyncpa [#allocation7], 1
    %s1407 = scalar_lea.sflag [#allocation7], 1
    %1408 = vsyncpa %s1407, 1
    %1409 = vsyncpa [#allocation10], 1
    %s1410 = scalar_lea.sflag [#allocation10], 1
    %1411 = vsyncpa %s1410, 1
    %1412 = vsyncpa [#allocation5], 1
    %s1413 = scalar_lea.sflag [#allocation5], 1
    %1414 = vsyncpa %s1413, 1

</llo_original>
